<compile_context>
chip_gen: v6e
topology: v6e:2x2x1
jax: 0.10.0
libtpu: 0.0.40
codegen_flags: <defaults>
</compile_context>

<pallas_src>
import jax
import jax.numpy as jnp
from jax.experimental import pallas as pl
from jax.experimental.pallas import tpu as pltpu


FEATURE_VECTOR = 128                 # feature_vector arg of Classifier
IN_DIM = FEATURE_VECTOR + 512        # fc1 input dim = 640
H1 = 1024
H2 = 128
NUM_CLASSES = 10
OUT_PAD = 128                        # lane-dense padded output width
BN_EPS = 1e-5


def _round_up(x, m):
    return ((x + m - 1) // m) * m


def classifier_kernel(x_ref, w1_ref, b1_ref, w2_ref, b2_ref, w3_ref, b3_ref,
                      o_ref):
    # Activations are cast to bf16 per-matmul for full MXU rate; accumulation
    # and all elementwise math stay f32 (v5e VPU/EUP have no bf16 path).
    x = x_ref[...].astype(jnp.bfloat16)                          # (TB, 640)

    # fc1 + ReLU   (dropout: identity in eval mode)
    h1 = jnp.dot(x, w1_ref[...], preferred_element_type=jnp.float32)
    h1 = jnp.maximum(h1 + b1_ref[...], 0.0)                      # (TB, 1024)

    # fc2 with BatchNorm1d (eval) folded into W2/b2, then ReLU
    h2 = jnp.dot(h1.astype(jnp.bfloat16), w2_ref[...],
                 preferred_element_type=jnp.float32)
    h2 = jnp.maximum(h2 + b2_ref[...], 0.0)                      # (TB, 128)

    # fc3 (output padded to 128 lanes; extra columns are zero)
    out = jnp.dot(h2.astype(jnp.bfloat16), w3_ref[...],
                  preferred_element_type=jnp.float32)
    o_ref[...] = (out + b3_ref[...]).astype(o_ref.dtype)         # (TB, 128)


def prepare_params(params):
    """One-time transform of raw (PyTorch-style, transposed) f32 params into
    the kernel's fused / padded / bf16 representation."""
    (w1, b1, w2, b2, gamma, beta, mean, var, w3, b3) = params

    # Fold eval-mode BatchNorm1d into fc2:  BN(x@W2+b2) = x@(W2*s) + (b2-m)*s+beta
    scale = gamma * jax.lax.rsqrt(var + BN_EPS)                  # (1, 128)
    w2f = w2 * scale                                             # col-wise scale
    b2f = (b2 - mean) * scale + beta

    # Pad fc3 to a lane-dense 128-wide output (zero columns -> no leakage).
    w3p = jnp.zeros((H2, OUT_PAD), jnp.float32).at[:, :NUM_CLASSES].set(w3)
    b3p = jnp.zeros((1, OUT_PAD), jnp.float32).at[:, :NUM_CLASSES].set(b3)

    return (w1.astype(jnp.bfloat16), b1,
            w2f.astype(jnp.bfloat16), b2f,
            w3p.astype(jnp.bfloat16), b3p)


def classifier_forward(x, prepped_params, *, tile_b=256):
    w1, b1, w2, b2, w3, b3 = prepped_params
    B = x.shape[0]

    # Batch tile: multiple of 16 (clean bf16 sublane packing), capped at tile_b.
    tb = min(tile_b, _round_up(B, 16))
    Bp = _round_up(B, tb)
    if Bp != B:
        x = jnp.pad(x, ((0, Bp - B), (0, 0)))

    out = pl.pallas_call(
        classifier_kernel,
        out_shape=jax.ShapeDtypeStruct((Bp, OUT_PAD), jnp.float32),
        grid=(pl.cdiv(Bp, tb),),
        in_specs=[
            # Activation stream: tiled along the batch axis.
            pl.BlockSpec((tb, IN_DIM), lambda i: (i, 0)),
            # Weights / biases: constant index map -> fetched once, VMEM-resident.
            pl.BlockSpec((IN_DIM, H1), lambda i: (0, 0)),
            pl.BlockSpec((1, H1), lambda i: (0, 0)),
            pl.BlockSpec((H1, H2), lambda i: (0, 0)),
            pl.BlockSpec((1, H2), lambda i: (0, 0)),
            pl.BlockSpec((H2, OUT_PAD), lambda i: (0, 0)),
            pl.BlockSpec((1, OUT_PAD), lambda i: (0, 0)),
        ],
        out_specs=pl.BlockSpec((tb, OUT_PAD), lambda i: (i, 0)),
        compiler_params=pltpu.CompilerParams(
            dimension_semantics=("parallel",)),
    )(x, w1, b1, w2, b2, w3, b3)

    return out[:B, :NUM_CLASSES]


def init_params(key):
    ks = jax.random.split(key, 6)
    # nn.Linear weights are (out, in) in PyTorch; stored transposed (in, out)
    # so the kernel computes x @ W + b directly.
    w1 = jax.random.normal(ks[0], (IN_DIM, H1), jnp.float32) * 0.02
    b1 = jax.random.normal(ks[1], (1, H1), jnp.float32) * 0.01
    w2 = jax.random.normal(ks[2], (H1, H2), jnp.float32) * 0.02
    b2 = jax.random.normal(ks[3], (1, H2), jnp.float32) * 0.01
    w3 = jax.random.normal(ks[4], (H2, NUM_CLASSES), jnp.float32) * 0.02
    b3 = jax.random.normal(ks[5], (1, NUM_CLASSES), jnp.float32) * 0.01
    # BatchNorm1d(128): affine params + running stats (eval mode).
    gamma = jnp.ones((1, H2), jnp.float32) * 1.1
    beta = jnp.ones((1, H2), jnp.float32) * 0.05
    mean = jnp.ones((1, H2), jnp.float32) * 0.02
    var = jnp.ones((1, H2), jnp.float32) * 0.9
    return (w1, b1, w2, b2, gamma, beta, mean, var, w3, b3)


def reference_forward(x, params):
    """Pure-JAX f32 reference matching the PyTorch module in eval mode."""
    (w1, b1, w2, b2, gamma, beta, mean, var, w3, b3) = params
    h1 = jnp.maximum(x @ w1 + b1, 0.0)
    h2 = x = h1 @ w2 + b2
    h2 = (h2 - mean) * jax.lax.rsqrt(var + BN_EPS) * gamma + beta
    h2 = jnp.maximum(h2, 0.0)
    return h2 @ w3 + b3


if __name__ == "__main__":
    key = jax.random.PRNGKey(0)
    k_x, k_p = jax.random.split(key)
    B = 8
    x = jax.random.normal(k_x, (B, IN_DIM), jnp.float32)

    params = init_params(k_p)
    prepped = prepare_params(params)          # one-time param transform

    out = classifier_forward(x, prepped)
    out = jax.block_until_ready(out)

    ref = reference_forward(x, params)
    assert out.shape == (B, NUM_CLASSES), out.shape
    # bf16 matmul operands (f32 accumulation) -> loosened tolerance vs f32 ref.
    assert jnp.allclose(out, ref, atol=2e-2, rtol=2e-2), (
        float(jnp.max(jnp.abs(out - ref))))
    print("KERNEL_OK")
</pallas_src>

<mosaic_0001>
module attributes {stable_mosaic.version = 11 : i64} {
  func.func @classifier_kernel(%arg0: i32, %arg1: memref<16x640xf32, #tpu.memory_space<vmem>>, %arg2: memref<640x1024xbf16, #tpu.memory_space<vmem>>, %arg3: memref<1x1024xf32, #tpu.memory_space<vmem>>, %arg4: memref<1024x128xbf16, #tpu.memory_space<vmem>>, %arg5: memref<1x128xf32, #tpu.memory_space<vmem>>, %arg6: memref<128x128xbf16, #tpu.memory_space<vmem>>, %arg7: memref<1x128xf32, #tpu.memory_space<vmem>>, %arg8: memref<16x128xf32, #tpu.memory_space<vmem>>) attributes {dimension_semantics = [#tpu.dimension_semantics<parallel>], iteration_bounds = array<i64: 1>, scalar_prefetch = 0 : i64, scratch_operands = 0 : i64, tpu.core_type = #tpu.core_type<tc>, window_params = [{transform_indices = @transform_0, window_bounds = array<i64: 16, 640>}, {pipeline_mode = #tpu.pipeline_mode<synchronous>, transform_indices = @transform_1, window_bounds = array<i64: 640, 1024>}, {pipeline_mode = #tpu.pipeline_mode<synchronous>, transform_indices = @transform_2, window_bounds = array<i64: 1, 1024>}, {pipeline_mode = #tpu.pipeline_mode<synchronous>, transform_indices = @transform_3, window_bounds = array<i64: 1024, 128>}, {pipeline_mode = #tpu.pipeline_mode<synchronous>, transform_indices = @transform_4, window_bounds = array<i64: 1, 128>}, {pipeline_mode = #tpu.pipeline_mode<synchronous>, transform_indices = @transform_5, window_bounds = array<i64: 128, 128>}, {pipeline_mode = #tpu.pipeline_mode<synchronous>, transform_indices = @transform_6, window_bounds = array<i64: 1, 128>}, {transform_indices = @transform_7, window_bounds = array<i64: 16, 128>}]} {
    %c0 = arith.constant 0 : index
    %c0_0 = arith.constant 0 : index
    %0 = vector.load %arg1[%c0, %c0_0] : memref<16x640xf32, #tpu.memory_space<vmem>>, vector<16x640xf32>
    %1 = arith.truncf %0 : vector<16x640xf32> to vector<16x640xbf16>
    %c0_1 = arith.constant 0 : index
    %c0_2 = arith.constant 0 : index
    %2 = vector.load %arg2[%c0_1, %c0_2] : memref<640x1024xbf16, #tpu.memory_space<vmem>>, vector<640x1024xbf16>
    %cst = arith.constant dense<0.000000e+00> : vector<16x1024xf32>
    %3 = tpu.matmul %1, %2, %cst {dimension_numbers = #tpu.dot_dimension_numbers<[1], [0], [0], [1], [0, 0, 1, 1], [], []>} : vector<16x640xbf16>, vector<640x1024xbf16>, vector<16x1024xf32> -> vector<16x1024xf32>
    %c0_3 = arith.constant 0 : index
    %c0_4 = arith.constant 0 : index
    %4 = vector.load %arg3[%c0_3, %c0_4] : memref<1x1024xf32, #tpu.memory_space<vmem>>, vector<1x1024xf32>
    %5 = vector.broadcast %4 : vector<1x1024xf32> to vector<16x1024xf32>
    %6 = arith.addf %3, %5 : vector<16x1024xf32>
    %cst_5 = arith.constant 0.000000e+00 : f32
    %7 = vector.broadcast %cst_5 : f32 to vector<16x1024xf32>
    %8 = arith.maximumf %6, %7 : vector<16x1024xf32>
    %9 = arith.truncf %8 : vector<16x1024xf32> to vector<16x1024xbf16>
    %c0_6 = arith.constant 0 : index
    %c0_7 = arith.constant 0 : index
    %10 = vector.load %arg4[%c0_6, %c0_7] : memref<1024x128xbf16, #tpu.memory_space<vmem>>, vector<1024x128xbf16>
    %cst_8 = arith.constant dense<0.000000e+00> : vector<16x128xf32>
    %11 = tpu.matmul %9, %10, %cst_8 {dimension_numbers = #tpu.dot_dimension_numbers<[1], [0], [0], [1], [0, 0, 1, 1], [], []>} : vector<16x1024xbf16>, vector<1024x128xbf16>, vector<16x128xf32> -> vector<16x128xf32>
    %c0_9 = arith.constant 0 : index
    %c0_10 = arith.constant 0 : index
    %12 = vector.load %arg5[%c0_9, %c0_10] : memref<1x128xf32, #tpu.memory_space<vmem>>, vector<1x128xf32>
    %13 = vector.broadcast %12 : vector<1x128xf32> to vector<16x128xf32>
    %14 = arith.addf %11, %13 : vector<16x128xf32>
    %cst_11 = arith.constant 0.000000e+00 : f32
    %15 = vector.broadcast %cst_11 : f32 to vector<16x128xf32>
    %16 = arith.maximumf %14, %15 : vector<16x128xf32>
    %17 = arith.truncf %16 : vector<16x128xf32> to vector<16x128xbf16>
    %c0_12 = arith.constant 0 : index
    %c0_13 = arith.constant 0 : index
    %18 = vector.load %arg6[%c0_12, %c0_13] : memref<128x128xbf16, #tpu.memory_space<vmem>>, vector<128x128xbf16>
    %cst_14 = arith.constant dense<0.000000e+00> : vector<16x128xf32>
    %19 = tpu.matmul %17, %18, %cst_14 {dimension_numbers = #tpu.dot_dimension_numbers<[1], [0], [0], [1], [0, 0, 1, 1], [], []>} : vector<16x128xbf16>, vector<128x128xbf16>, vector<16x128xf32> -> vector<16x128xf32>
    %c0_15 = arith.constant 0 : index
    %c0_16 = arith.constant 0 : index
    %20 = vector.load %arg7[%c0_15, %c0_16] : memref<1x128xf32, #tpu.memory_space<vmem>>, vector<1x128xf32>
    %21 = vector.broadcast %20 : vector<1x128xf32> to vector<16x128xf32>
    %22 = arith.addf %19, %21 : vector<16x128xf32>
    %c0_17 = arith.constant 0 : index
    %c0_18 = arith.constant 0 : index
    %23 = vector.load %arg8[%c0_17, %c0_18] : memref<16x128xf32, #tpu.memory_space<vmem>>, vector<16x128xf32>
    tpu.vector_store %arg8[%c0_17, %c0_18], %22 {strides = array<i32>} : memref<16x128xf32, #tpu.memory_space<vmem>>, vector<16x128xf32>,
    return
  }
  func.func @transform_0(%arg0: i32) -> (i32, i32) {
    %c0_i32 = arith.constant 0 : i32
    %c0_i32_0 = arith.constant 0 : i32
    return %arg0, %c0_i32 : i32, i32
  }
  func.func @transform_1(%arg0: i32) -> (i32, i32) {
    %c0_i32 = arith.constant 0 : i32
    %c0_i32_0 = arith.constant 0 : i32
    %c0_i32_1 = arith.constant 0 : i32
    return %c0_i32, %c0_i32_0 : i32, i32
  }
  func.func @transform_2(%arg0: i32) -> (i32, i32) {
    %c0_i32 = arith.constant 0 : i32
    %c0_i32_0 = arith.constant 0 : i32
    %c0_i32_1 = arith.constant 0 : i32
    return %c0_i32, %c0_i32_0 : i32, i32
  }
  func.func @transform_3(%arg0: i32) -> (i32, i32) {
    %c0_i32 = arith.constant 0 : i32
    %c0_i32_0 = arith.constant 0 : i32
    %c0_i32_1 = arith.constant 0 : i32
    return %c0_i32, %c0_i32_0 : i32, i32
  }
  func.func @transform_4(%arg0: i32) -> (i32, i32) {
    %c0_i32 = arith.constant 0 : i32
    %c0_i32_0 = arith.constant 0 : i32
    %c0_i32_1 = arith.constant 0 : i32
    return %c0_i32, %c0_i32_0 : i32, i32
  }
  func.func @transform_5(%arg0: i32) -> (i32, i32) {
    %c0_i32 = arith.constant 0 : i32
    %c0_i32_0 = arith.constant 0 : i32
    %c0_i32_1 = arith.constant 0 : i32
    return %c0_i32, %c0_i32_0 : i32, i32
  }
  func.func @transform_6(%arg0: i32) -> (i32, i32) {
    %c0_i32 = arith.constant 0 : i32
    %c0_i32_0 = arith.constant 0 : i32
    %c0_i32_1 = arith.constant 0 : i32
    return %c0_i32, %c0_i32_0 : i32, i32
  }
  func.func @transform_7(%arg0: i32) -> (i32, i32) {
    %c0_i32 = arith.constant 0 : i32
    %c0_i32_0 = arith.constant 0 : i32
    return %arg0, %c0_i32 : i32, i32
  }
}

</mosaic_0001>

<llo_original>
// kernel: tpu_custom_call.1
$region0: #{tpu_custom_call.1}
  #allocation0 [shape = 'u32[]', space=smem, size = 0x4, offset = 0x4, fixed_abs, tag = 'smem constant byte address 0x4 - core index']
  #allocation1 [shape = 'u32[144,128]{1,0:T(1,128)}', space=vmem, size = 0x12000, scoped, tag = 'internal scratch']
  %s0 = inlined_call_operand.hbm [shape: f32[16,640], index: 0, kind: input, shape index: {}]
  %s1 = inlined_call_operand.hbm [shape: bf16[640,1024], index: 1, kind: input, shape index: {}]
  %s2 = inlined_call_operand.hbm [shape: f32[1,1024], index: 2, kind: input, shape index: {}]
  %s3 = inlined_call_operand.hbm [shape: bf16[1024,128], index: 3, kind: input, shape index: {}]
  %s4 = inlined_call_operand.hbm [shape: f32[1,128], index: 4, kind: input, shape index: {}]
  %s5 = inlined_call_operand.hbm [shape: bf16[128,128], index: 5, kind: input, shape index: {}]
  %s6 = inlined_call_operand.hbm [shape: f32[1,128], index: 6, kind: input, shape index: {}]
  %s7 = inlined_call_operand.hbm [shape: f32[16,128], index: 7, kind: output, shape index: {}]
  %s8 = sld [smem:[#allocation0]]
  $region66: #{tpu_custom_call.1} parent=0
    _
  %s10 = ssub.s32 1, %s8
  %s11 = scalar_select 0, %s10, %s8
  $region1: #{tpu_custom_call.1} parent=0
    #allocation2 [shape = 'u8[40960]{0}', space=vmem, size = 0xa000, scoped, tag = 'input window, operand 0, single buffered']
    #allocation3 [shape = 's32[1]{0}', space=sflag, size = 0x4, scoped, tag = 'scoped memory for tpu_custom_call.1']
    #allocation4 [shape = 's32[1]{0}', space=sflag, size = 0x4, scoped, tag = 'scoped memory for tpu_custom_call.1']
    #allocation5 [shape = 'u8[1310720]{0}', space=vmem, size = 0x140000, scoped, tag = 'input window, operand 1, single buffered']
    #allocation6 [shape = 's32[1]{0}', space=sflag, size = 0x4, scoped, tag = 'scoped memory for tpu_custom_call.1']
    #allocation7 [shape = 'u8[4096]{0}', space=vmem, size = 0x1000, scoped, tag = 'input window, operand 2, single buffered']
    #allocation8 [shape = 'u8[262144]{0}', space=vmem, size = 0x40000, scoped, tag = 'input window, operand 3, single buffered']
    #allocation9 [shape = 's32[1]{0}', space=sflag, size = 0x4, scoped, tag = 'scoped memory for tpu_custom_call.1']
    #allocation10 [shape = 'u8[512]{0}', space=vmem, size = 0x400, scoped, tag = 'input window, operand 4, single buffered']
    #allocation11 [shape = 'u8[32768]{0}', space=vmem, size = 0x8000, scoped, tag = 'input window, operand 5, single buffered']
    #allocation12 [shape = 's32[1]{0}', space=sflag, size = 0x4, scoped, tag = 'scoped memory for tpu_custom_call.1']
    #allocation13 [shape = 'u8[512]{0}', space=vmem, size = 0x400, scoped, tag = 'input window, operand 6, single buffered']
    #allocation14 [shape = 'u8[8192]{0}', space=vmem, size = 0x2000, scoped, tag = 'output window, operand 0, single buffered']
    %12 = vsyncpa [#allocation3], 0
    %13 = vsyncpa [#allocation6], 0
    %14 = vsyncpa [#allocation9], 0
    %15 = vsyncpa [#allocation12], 0
    %16 = vsyncpa [#allocation4], 0
    // Predicated region
    $region2: #{tpu_custom_call.1} parent=1 // pred_check
      _
    $region3: #{tpu_custom_call.1} parent=1 // pred_check_branch
      %18 = sbr.rel (0) target = $region5
    $region4: #{tpu_custom_call.1} parent=1 // pred_region
      %s20 = ssub.s32 1280, 1280
      %21 = vsyncadd [#allocation3], %s20
      %s22 = sshll.u32 [#allocation2], 4
      %s23 = int_to_ptr.vmem [resolvable:$true] %s22
      %28 = dma.hbm_to_vmem [thread:$0]  %s0, 1280, %s23, [#allocation3], 640, 640, 40
    $region5: #{tpu_custom_call.1} parent=1 // pred_fallthru
      _
    // Predicated region
    $region6: #{tpu_custom_call.1} parent=1 // pred_check
      _
    $region7: #{tpu_custom_call.1} parent=1 // pred_check_branch
      %30 = sbr.rel (0) target = $region9
    $region8: #{tpu_custom_call.1} parent=1 // pred_region
      %s32 = ssub.s32 40960, 40960
      %33 = vsyncadd [#allocation6], %s32
      %s34 = sshll.u32 [#allocation5], 4
      %s35 = int_to_ptr.vmem [resolvable:$true] %s34
      %40 = dma.hbm_to_vmem [thread:$0]  %s1, 40960, %s35, [#allocation6], 512, 512, 32
    $region9: #{tpu_custom_call.1} parent=1 // pred_fallthru
      _
    // Predicated region
    $region10: #{tpu_custom_call.1} parent=1 // pred_check
      _
    $region11: #{tpu_custom_call.1} parent=1 // pred_check_branch
      %42 = sbr.rel (0) target = $region13
    $region12: #{tpu_custom_call.1} parent=1 // pred_region
      %s44 = ssub.s32 128, 128
      %45 = vsyncadd [#allocation6], %s44
      %s47 = sshll.u32 [#allocation7], 4
      %s48 = int_to_ptr.vmem [resolvable:$true] %s47
      %50 = dma.hbm_to_vmem [thread:$0]  %s2, 128, %s48, [#allocation6]
    $region13: #{tpu_custom_call.1} parent=1 // pred_fallthru
      _
    // Predicated region
    $region14: #{tpu_custom_call.1} parent=1 // pred_check
      _
    $region15: #{tpu_custom_call.1} parent=1 // pred_check_branch
      %52 = sbr.rel (0) target = $region17
    $region16: #{tpu_custom_call.1} parent=1 // pred_region
      %s54 = ssub.s32 8192, 8192
      %55 = vsyncadd [#allocation9], %s54
      %s56 = sshll.u32 [#allocation8], 4
      %s57 = int_to_ptr.vmem [resolvable:$true] %s56
      %62 = dma.hbm_to_vmem [thread:$0]  %s3, 8192, %s57, [#allocation9], 64, 64, 4
    $region17: #{tpu_custom_call.1} parent=1 // pred_fallthru
      _
    // Predicated region
    $region18: #{tpu_custom_call.1} parent=1 // pred_check
      _
    $region19: #{tpu_custom_call.1} parent=1 // pred_check_branch
      %64 = sbr.rel (0) target = $region21
    $region20: #{tpu_custom_call.1} parent=1 // pred_region
      %s66 = ssub.s32 16, 16
      %67 = vsyncadd [#allocation9], %s66
      %s69 = sshll.u32 [#allocation10], 4
      %s70 = int_to_ptr.vmem [resolvable:$true] %s69
      %72 = dma.hbm_to_vmem [thread:$0]  %s4, 16, %s70, [#allocation9]
    $region21: #{tpu_custom_call.1} parent=1 // pred_fallthru
      _
    // Predicated region
    $region22: #{tpu_custom_call.1} parent=1 // pred_check
      _
    $region23: #{tpu_custom_call.1} parent=1 // pred_check_branch
      %74 = sbr.rel (0) target = $region25
    $region24: #{tpu_custom_call.1} parent=1 // pred_region
      %s76 = ssub.s32 1024, 1024
      %77 = vsyncadd [#allocation12], %s76
      %s78 = sshll.u32 [#allocation11], 4
      %s79 = int_to_ptr.vmem [resolvable:$true] %s78
      %84 = dma.hbm_to_vmem [thread:$0]  %s5, 1024, %s79, [#allocation12], 64, 64, 4
    $region25: #{tpu_custom_call.1} parent=1 // pred_fallthru
      _
    // Predicated region
    $region26: #{tpu_custom_call.1} parent=1 // pred_check
      _
    $region27: #{tpu_custom_call.1} parent=1 // pred_check_branch
      %86 = sbr.rel (0) target = $region29
    $region28: #{tpu_custom_call.1} parent=1 // pred_region
      %s88 = ssub.s32 16, 16
      %89 = vsyncadd [#allocation12], %s88
      %s91 = sshll.u32 [#allocation13], 4
      %s92 = int_to_ptr.vmem [resolvable:$true] %s91
      %94 = dma.hbm_to_vmem [thread:$0]  %s6, 16, %s92, [#allocation12]
    $region29: #{tpu_custom_call.1} parent=1 // pred_fallthru
      _
    // Predicated region
    $region30: #{tpu_custom_call.1} parent=1 // pred_check
      _
    $region31: #{tpu_custom_call.1} parent=1 // pred_check_branch
      %96 = sbr.rel (0) target = $region33
    $region32: #{tpu_custom_call.1} parent=1 // pred_region
      %97 = dma.done [#allocation3], 1280
    $region33: #{tpu_custom_call.1} parent=1 // pred_fallthru
      _
    // Predicated region
    $region34: #{tpu_custom_call.1} parent=1 // pred_check
      _
    $region35: #{tpu_custom_call.1} parent=1 // pred_check_branch
      %99 = sbr.rel (0) target = $region37
    $region36: #{tpu_custom_call.1} parent=1 // pred_region
      %100 = dma.done [#allocation6], 40960
    $region37: #{tpu_custom_call.1} parent=1 // pred_fallthru
      _
    // Predicated region
    $region38: #{tpu_custom_call.1} parent=1 // pred_check
      _
    $region39: #{tpu_custom_call.1} parent=1 // pred_check_branch
      %102 = sbr.rel (0) target = $region41
    $region40: #{tpu_custom_call.1} parent=1 // pred_region
      %103 = dma.done [#allocation6], 128
    $region41: #{tpu_custom_call.1} parent=1 // pred_fallthru
      _
    // Predicated region
    $region42: #{tpu_custom_call.1} parent=1 // pred_check
      _
    $region43: #{tpu_custom_call.1} parent=1 // pred_check_branch
      %105 = sbr.rel (0) target = $region45
    $region44: #{tpu_custom_call.1} parent=1 // pred_region
      %106 = dma.done [#allocation9], 8192
    $region45: #{tpu_custom_call.1} parent=1 // pred_fallthru
      _
    // Predicated region
    $region46: #{tpu_custom_call.1} parent=1 // pred_check
      _
    $region47: #{tpu_custom_call.1} parent=1 // pred_check_branch
      %108 = sbr.rel (0) target = $region49
    $region48: #{tpu_custom_call.1} parent=1 // pred_region
      %109 = dma.done [#allocation9], 16
    $region49: #{tpu_custom_call.1} parent=1 // pred_fallthru
      _
    // Predicated region
    $region50: #{tpu_custom_call.1} parent=1 // pred_check
      _
    $region51: #{tpu_custom_call.1} parent=1 // pred_check_branch
      %111 = sbr.rel (0) target = $region53
    $region52: #{tpu_custom_call.1} parent=1 // pred_region
      %112 = dma.done [#allocation12], 1024
    $region53: #{tpu_custom_call.1} parent=1 // pred_fallthru
      _
    // Predicated region
    $region54: #{tpu_custom_call.1} parent=1 // pred_check
      _
    $region55: #{tpu_custom_call.1} parent=1 // pred_check_branch
      %114 = sbr.rel (0) target = $region57
    $region56: #{tpu_custom_call.1} parent=1 // pred_region
      %115 = dma.done [#allocation12], 16
    $region57: #{tpu_custom_call.1} parent=1 // pred_fallthru
      _
    %v117 = vld [vmem:[#allocation2] sm:$0xff]
    %v118 = vld [vmem:[#allocation2 + $0x8] sm:$0xff]
    %v119 = vld [vmem:[#allocation2 + $0x10] sm:$0xff]
    %v120 = vld [vmem:[#allocation2 + $0x18] sm:$0xff]
    %v121 = vld [vmem:[#allocation2 + $0x20] sm:$0xff]
    %v122 = vld [vmem:[#allocation2 + $0x28] sm:$0xff]
    %v123 = vld [vmem:[#allocation2 + $0x30] sm:$0xff]
    %v124 = vld [vmem:[#allocation2 + $0x38] sm:$0xff]
    %v125 = vld [vmem:[#allocation2 + $0x40] sm:$0xff]
    %v126 = vld [vmem:[#allocation2 + $0x48] sm:$0xff]
    %v127 = vpack.c.bf16 %v122, %v117
    %v128 = vpack.c.bf16 %v123, %v118
    %v129 = vpack.c.bf16 %v124, %v119
    %v130 = vpack.c.bf16 %v125, %v120
    %v131 = vpack.c.bf16 %v126, %v121
    %v132 = vld [vmem:[#allocation5] sm:$0xff]
    %v133 = vld [vmem:[#allocation5 + $0x8] sm:$0xff]
    %v134 = vld [vmem:[#allocation5 + $0x10] sm:$0xff]
    %v135 = vld [vmem:[#allocation5 + $0x18] sm:$0xff]
    %v136 = vld [vmem:[#allocation5 + $0x20] sm:$0xff]
    %v137 = vld [vmem:[#allocation5 + $0x28] sm:$0xff]
    %v138 = vld [vmem:[#allocation5 + $0x30] sm:$0xff]
    %v139 = vld [vmem:[#allocation5 + $0x38] sm:$0xff]
    %v140 = vld [vmem:[#allocation5 + $0x40] sm:$0xff]
    %v141 = vld [vmem:[#allocation5 + $0x48] sm:$0xff]
    %v142 = vld [vmem:[#allocation5 + $0x50] sm:$0xff]
    %v143 = vld [vmem:[#allocation5 + $0x58] sm:$0xff]
    %v144 = vld [vmem:[#allocation5 + $0x60] sm:$0xff]
    %v145 = vld [vmem:[#allocation5 + $0x68] sm:$0xff]
    %v146 = vld [vmem:[#allocation5 + $0x70] sm:$0xff]
    %v147 = vld [vmem:[#allocation5 + $0x78] sm:$0xff]
    %v148 = vld [vmem:[#allocation5 + $0x80] sm:$0xff]
    %v149 = vld [vmem:[#allocation5 + $0x88] sm:$0xff]
    %v150 = vld [vmem:[#allocation5 + $0x90] sm:$0xff]
    %v151 = vld [vmem:[#allocation5 + $0x98] sm:$0xff]
    %v152 = vld [vmem:[#allocation5 + $0xa0] sm:$0xff]
    %v153 = vld [vmem:[#allocation5 + $0xa8] sm:$0xff]
    %v154 = vld [vmem:[#allocation5 + $0xb0] sm:$0xff]
    %v155 = vld [vmem:[#allocation5 + $0xb8] sm:$0xff]
    %v156 = vld [vmem:[#allocation5 + $0xc0] sm:$0xff]
    %v157 = vld [vmem:[#allocation5 + $0xc8] sm:$0xff]
    %v158 = vld [vmem:[#allocation5 + $0xd0] sm:$0xff]
    %v159 = vld [vmem:[#allocation5 + $0xd8] sm:$0xff]
    %v160 = vld [vmem:[#allocation5 + $0xe0] sm:$0xff]
    %v161 = vld [vmem:[#allocation5 + $0xe8] sm:$0xff]
    %v162 = vld [vmem:[#allocation5 + $0xf0] sm:$0xff]
    %v163 = vld [vmem:[#allocation5 + $0xf8] sm:$0xff]
    %v164 = vld [vmem:[#allocation5 + $0x100] sm:$0xff]
    %v165 = vld [vmem:[#allocation5 + $0x108] sm:$0xff]
    %v166 = vld [vmem:[#allocation5 + $0x110] sm:$0xff]
    %v167 = vld [vmem:[#allocation5 + $0x118] sm:$0xff]
    %v168 = vld [vmem:[#allocation5 + $0x120] sm:$0xff]
    %v169 = vld [vmem:[#allocation5 + $0x128] sm:$0xff]
    %v170 = vld [vmem:[#allocation5 + $0x130] sm:$0xff]
    %v171 = vld [vmem:[#allocation5 + $0x138] sm:$0xff]
    %v172 = vld [vmem:[#allocation5 + $0x140] sm:$0xff]
    %v173 = vld [vmem:[#allocation5 + $0x148] sm:$0xff]
    %v174 = vld [vmem:[#allocation5 + $0x150] sm:$0xff]
    %v175 = vld [vmem:[#allocation5 + $0x158] sm:$0xff]
    %v176 = vld [vmem:[#allocation5 + $0x160] sm:$0xff]
    %v177 = vld [vmem:[#allocation5 + $0x168] sm:$0xff]
    %v178 = vld [vmem:[#allocation5 + $0x170] sm:$0xff]
    %v179 = vld [vmem:[#allocation5 + $0x178] sm:$0xff]
    %v180 = vld [vmem:[#allocation5 + $0x180] sm:$0xff]
    %v181 = vld [vmem:[#allocation5 + $0x188] sm:$0xff]
    %v182 = vld [vmem:[#allocation5 + $0x190] sm:$0xff]
    %v183 = vld [vmem:[#allocation5 + $0x198] sm:$0xff]
    %v184 = vld [vmem:[#allocation5 + $0x1a0] sm:$0xff]
    %v185 = vld [vmem:[#allocation5 + $0x1a8] sm:$0xff]
    %v186 = vld [vmem:[#allocation5 + $0x1b0] sm:$0xff]
    %v187 = vld [vmem:[#allocation5 + $0x1b8] sm:$0xff]
    %v188 = vld [vmem:[#allocation5 + $0x1c0] sm:$0xff]
    %v189 = vld [vmem:[#allocation5 + $0x1c8] sm:$0xff]
    %v190 = vld [vmem:[#allocation5 + $0x1d0] sm:$0xff]
    %v191 = vld [vmem:[#allocation5 + $0x1d8] sm:$0xff]
    %v192 = vld [vmem:[#allocation5 + $0x1e0] sm:$0xff]
    %v193 = vld [vmem:[#allocation5 + $0x1e8] sm:$0xff]
    %v194 = vld [vmem:[#allocation5 + $0x1f0] sm:$0xff]
    %v195 = vld [vmem:[#allocation5 + $0x1f8] sm:$0xff]
    %v196 = vld [vmem:[#allocation5 + $0x200] sm:$0xff]
    %v197 = vld [vmem:[#allocation5 + $0x208] sm:$0xff]
    %v198 = vld [vmem:[#allocation5 + $0x210] sm:$0xff]
    %v199 = vld [vmem:[#allocation5 + $0x218] sm:$0xff]
    %v200 = vld [vmem:[#allocation5 + $0x220] sm:$0xff]
    %v201 = vld [vmem:[#allocation5 + $0x228] sm:$0xff]
    %v202 = vld [vmem:[#allocation5 + $0x230] sm:$0xff]
    %v203 = vld [vmem:[#allocation5 + $0x238] sm:$0xff]
    %v204 = vld [vmem:[#allocation5 + $0x240] sm:$0xff]
    %v205 = vld [vmem:[#allocation5 + $0x248] sm:$0xff]
    %v206 = vld [vmem:[#allocation5 + $0x250] sm:$0xff]
    %v207 = vld [vmem:[#allocation5 + $0x258] sm:$0xff]
    %v208 = vld [vmem:[#allocation5 + $0x260] sm:$0xff]
    %v209 = vld [vmem:[#allocation5 + $0x268] sm:$0xff]
    %v210 = vld [vmem:[#allocation5 + $0x270] sm:$0xff]
    %v211 = vld [vmem:[#allocation5 + $0x278] sm:$0xff]
    %v212 = vld [vmem:[#allocation5 + $0x280] sm:$0xff]
    %v213 = vld [vmem:[#allocation5 + $0x288] sm:$0xff]
    %v214 = vld [vmem:[#allocation5 + $0x290] sm:$0xff]
    %v215 = vld [vmem:[#allocation5 + $0x298] sm:$0xff]
    %v216 = vld [vmem:[#allocation5 + $0x2a0] sm:$0xff]
    %v217 = vld [vmem:[#allocation5 + $0x2a8] sm:$0xff]
    %v218 = vld [vmem:[#allocation5 + $0x2b0] sm:$0xff]
    %v219 = vld [vmem:[#allocation5 + $0x2b8] sm:$0xff]
    %v220 = vld [vmem:[#allocation5 + $0x2c0] sm:$0xff]
    %v221 = vld [vmem:[#allocation5 + $0x2c8] sm:$0xff]
    %v222 = vld [vmem:[#allocation5 + $0x2d0] sm:$0xff]
    %v223 = vld [vmem:[#allocation5 + $0x2d8] sm:$0xff]
    %v224 = vld [vmem:[#allocation5 + $0x2e0] sm:$0xff]
    %v225 = vld [vmem:[#allocation5 + $0x2e8] sm:$0xff]
    %v226 = vld [vmem:[#allocation5 + $0x2f0] sm:$0xff]
    %v227 = vld [vmem:[#allocation5 + $0x2f8] sm:$0xff]
    %v228 = vld [vmem:[#allocation5 + $0x300] sm:$0xff]
    %v229 = vld [vmem:[#allocation5 + $0x308] sm:$0xff]
    %v230 = vld [vmem:[#allocation5 + $0x310] sm:$0xff]
    %v231 = vld [vmem:[#allocation5 + $0x318] sm:$0xff]
    %v232 = vld [vmem:[#allocation5 + $0x320] sm:$0xff]
    %v233 = vld [vmem:[#allocation5 + $0x328] sm:$0xff]
    %v234 = vld [vmem:[#allocation5 + $0x330] sm:$0xff]
    %v235 = vld [vmem:[#allocation5 + $0x338] sm:$0xff]
    %v236 = vld [vmem:[#allocation5 + $0x340] sm:$0xff]
    %v237 = vld [vmem:[#allocation5 + $0x348] sm:$0xff]
    %v238 = vld [vmem:[#allocation5 + $0x350] sm:$0xff]
    %v239 = vld [vmem:[#allocation5 + $0x358] sm:$0xff]
    %v240 = vld [vmem:[#allocation5 + $0x360] sm:$0xff]
    %v241 = vld [vmem:[#allocation5 + $0x368] sm:$0xff]
    %v242 = vld [vmem:[#allocation5 + $0x370] sm:$0xff]
    %v243 = vld [vmem:[#allocation5 + $0x378] sm:$0xff]
    %v244 = vld [vmem:[#allocation5 + $0x380] sm:$0xff]
    %v245 = vld [vmem:[#allocation5 + $0x388] sm:$0xff]
    %v246 = vld [vmem:[#allocation5 + $0x390] sm:$0xff]
    %v247 = vld [vmem:[#allocation5 + $0x398] sm:$0xff]
    %v248 = vld [vmem:[#allocation5 + $0x3a0] sm:$0xff]
    %v249 = vld [vmem:[#allocation5 + $0x3a8] sm:$0xff]
    %v250 = vld [vmem:[#allocation5 + $0x3b0] sm:$0xff]
    %v251 = vld [vmem:[#allocation5 + $0x3b8] sm:$0xff]
    %v252 = vld [vmem:[#allocation5 + $0x3c0] sm:$0xff]
    %v253 = vld [vmem:[#allocation5 + $0x3c8] sm:$0xff]
    %v254 = vld [vmem:[#allocation5 + $0x3d0] sm:$0xff]
    %v255 = vld [vmem:[#allocation5 + $0x3d8] sm:$0xff]
    %v256 = vld [vmem:[#allocation5 + $0x3e0] sm:$0xff]
    %v257 = vld [vmem:[#allocation5 + $0x3e8] sm:$0xff]
    %v258 = vld [vmem:[#allocation5 + $0x3f0] sm:$0xff]
    %v259 = vld [vmem:[#allocation5 + $0x3f8] sm:$0xff]
    %v260 = vld [vmem:[#allocation5 + $0x400] sm:$0xff]
    %v261 = vld [vmem:[#allocation5 + $0x408] sm:$0xff]
    %v262 = vld [vmem:[#allocation5 + $0x410] sm:$0xff]
    %v263 = vld [vmem:[#allocation5 + $0x418] sm:$0xff]
    %v264 = vld [vmem:[#allocation5 + $0x420] sm:$0xff]
    %v265 = vld [vmem:[#allocation5 + $0x428] sm:$0xff]
    %v266 = vld [vmem:[#allocation5 + $0x430] sm:$0xff]
    %v267 = vld [vmem:[#allocation5 + $0x438] sm:$0xff]
    %v268 = vld [vmem:[#allocation5 + $0x440] sm:$0xff]
    %v269 = vld [vmem:[#allocation5 + $0x448] sm:$0xff]
    %v270 = vld [vmem:[#allocation5 + $0x450] sm:$0xff]
    %v271 = vld [vmem:[#allocation5 + $0x458] sm:$0xff]
    %v272 = vld [vmem:[#allocation5 + $0x460] sm:$0xff]
    %v273 = vld [vmem:[#allocation5 + $0x468] sm:$0xff]
    %v274 = vld [vmem:[#allocation5 + $0x470] sm:$0xff]
    %v275 = vld [vmem:[#allocation5 + $0x478] sm:$0xff]
    %v276 = vld [vmem:[#allocation5 + $0x480] sm:$0xff]
    %v277 = vld [vmem:[#allocation5 + $0x488] sm:$0xff]
    %v278 = vld [vmem:[#allocation5 + $0x490] sm:$0xff]
    %v279 = vld [vmem:[#allocation5 + $0x498] sm:$0xff]
    %v280 = vld [vmem:[#allocation5 + $0x4a0] sm:$0xff]
    %v281 = vld [vmem:[#allocation5 + $0x4a8] sm:$0xff]
    %v282 = vld [vmem:[#allocation5 + $0x4b0] sm:$0xff]
    %v283 = vld [vmem:[#allocation5 + $0x4b8] sm:$0xff]
    %v284 = vld [vmem:[#allocation5 + $0x4c0] sm:$0xff]
    %v285 = vld [vmem:[#allocation5 + $0x4c8] sm:$0xff]
    %v286 = vld [vmem:[#allocation5 + $0x4d0] sm:$0xff]
    %v287 = vld [vmem:[#allocation5 + $0x4d8] sm:$0xff]
    %v288 = vld [vmem:[#allocation5 + $0x4e0] sm:$0xff]
    %v289 = vld [vmem:[#allocation5 + $0x4e8] sm:$0xff]
    %v290 = vld [vmem:[#allocation5 + $0x4f0] sm:$0xff]
    %v291 = vld [vmem:[#allocation5 + $0x4f8] sm:$0xff]
    %v292 = vld [vmem:[#allocation5 + $0x500] sm:$0xff]
    %v293 = vld [vmem:[#allocation5 + $0x508] sm:$0xff]
    %v294 = vld [vmem:[#allocation5 + $0x510] sm:$0xff]
    %v295 = vld [vmem:[#allocation5 + $0x518] sm:$0xff]
    %v296 = vld [vmem:[#allocation5 + $0x520] sm:$0xff]
    %v297 = vld [vmem:[#allocation5 + $0x528] sm:$0xff]
    %v298 = vld [vmem:[#allocation5 + $0x530] sm:$0xff]
    %v299 = vld [vmem:[#allocation5 + $0x538] sm:$0xff]
    %v300 = vld [vmem:[#allocation5 + $0x540] sm:$0xff]
    %v301 = vld [vmem:[#allocation5 + $0x548] sm:$0xff]
    %v302 = vld [vmem:[#allocation5 + $0x550] sm:$0xff]
    %v303 = vld [vmem:[#allocation5 + $0x558] sm:$0xff]
    %v304 = vld [vmem:[#allocation5 + $0x560] sm:$0xff]
    %v305 = vld [vmem:[#allocation5 + $0x568] sm:$0xff]
    %v306 = vld [vmem:[#allocation5 + $0x570] sm:$0xff]
    %v307 = vld [vmem:[#allocation5 + $0x578] sm:$0xff]
    %v308 = vld [vmem:[#allocation5 + $0x580] sm:$0xff]
    %v309 = vld [vmem:[#allocation5 + $0x588] sm:$0xff]
    %v310 = vld [vmem:[#allocation5 + $0x590] sm:$0xff]
    %v311 = vld [vmem:[#allocation5 + $0x598] sm:$0xff]
    %v312 = vld [vmem:[#allocation5 + $0x5a0] sm:$0xff]
    %v313 = vld [vmem:[#allocation5 + $0x5a8] sm:$0xff]
    %v314 = vld [vmem:[#allocation5 + $0x5b0] sm:$0xff]
    %v315 = vld [vmem:[#allocation5 + $0x5b8] sm:$0xff]
    %v316 = vld [vmem:[#allocation5 + $0x5c0] sm:$0xff]
    %v317 = vld [vmem:[#allocation5 + $0x5c8] sm:$0xff]
    %v318 = vld [vmem:[#allocation5 + $0x5d0] sm:$0xff]
    %v319 = vld [vmem:[#allocation5 + $0x5d8] sm:$0xff]
    %v320 = vld [vmem:[#allocation5 + $0x5e0] sm:$0xff]
    %v321 = vld [vmem:[#allocation5 + $0x5e8] sm:$0xff]
    %v322 = vld [vmem:[#allocation5 + $0x5f0] sm:$0xff]
    %v323 = vld [vmem:[#allocation5 + $0x5f8] sm:$0xff]
    %v324 = vld [vmem:[#allocation5 + $0x600] sm:$0xff]
    %v325 = vld [vmem:[#allocation5 + $0x608] sm:$0xff]
    %v326 = vld [vmem:[#allocation5 + $0x610] sm:$0xff]
    %v327 = vld [vmem:[#allocation5 + $0x618] sm:$0xff]
    %v328 = vld [vmem:[#allocation5 + $0x620] sm:$0xff]
    %v329 = vld [vmem:[#allocation5 + $0x628] sm:$0xff]
    %v330 = vld [vmem:[#allocation5 + $0x630] sm:$0xff]
    %v331 = vld [vmem:[#allocation5 + $0x638] sm:$0xff]
    %v332 = vld [vmem:[#allocation5 + $0x640] sm:$0xff]
    %v333 = vld [vmem:[#allocation5 + $0x648] sm:$0xff]
    %v334 = vld [vmem:[#allocation5 + $0x650] sm:$0xff]
    %v335 = vld [vmem:[#allocation5 + $0x658] sm:$0xff]
    %v336 = vld [vmem:[#allocation5 + $0x660] sm:$0xff]
    %v337 = vld [vmem:[#allocation5 + $0x668] sm:$0xff]
    %v338 = vld [vmem:[#allocation5 + $0x670] sm:$0xff]
    %v339 = vld [vmem:[#allocation5 + $0x678] sm:$0xff]
    %v340 = vld [vmem:[#allocation5 + $0x680] sm:$0xff]
    %v341 = vld [vmem:[#allocation5 + $0x688] sm:$0xff]
    %v342 = vld [vmem:[#allocation5 + $0x690] sm:$0xff]
    %v343 = vld [vmem:[#allocation5 + $0x698] sm:$0xff]
    %v344 = vld [vmem:[#allocation5 + $0x6a0] sm:$0xff]
    %v345 = vld [vmem:[#allocation5 + $0x6a8] sm:$0xff]
    %v346 = vld [vmem:[#allocation5 + $0x6b0] sm:$0xff]
    %v347 = vld [vmem:[#allocation5 + $0x6b8] sm:$0xff]
    %v348 = vld [vmem:[#allocation5 + $0x6c0] sm:$0xff]
    %v349 = vld [vmem:[#allocation5 + $0x6c8] sm:$0xff]
    %v350 = vld [vmem:[#allocation5 + $0x6d0] sm:$0xff]
    %v351 = vld [vmem:[#allocation5 + $0x6d8] sm:$0xff]
    %v352 = vld [vmem:[#allocation5 + $0x6e0] sm:$0xff]
    %v353 = vld [vmem:[#allocation5 + $0x6e8] sm:$0xff]
    %v354 = vld [vmem:[#allocation5 + $0x6f0] sm:$0xff]
    %v355 = vld [vmem:[#allocation5 + $0x6f8] sm:$0xff]
    %v356 = vld [vmem:[#allocation5 + $0x700] sm:$0xff]
    %v357 = vld [vmem:[#allocation5 + $0x708] sm:$0xff]
    %v358 = vld [vmem:[#allocation5 + $0x710] sm:$0xff]
    %v359 = vld [vmem:[#allocation5 + $0x718] sm:$0xff]
    %v360 = vld [vmem:[#allocation5 + $0x720] sm:$0xff]
    %v361 = vld [vmem:[#allocation5 + $0x728] sm:$0xff]
    %v362 = vld [vmem:[#allocation5 + $0x730] sm:$0xff]
    %v363 = vld [vmem:[#allocation5 + $0x738] sm:$0xff]
    %v364 = vld [vmem:[#allocation5 + $0x740] sm:$0xff]
    %v365 = vld [vmem:[#allocation5 + $0x748] sm:$0xff]
    %v366 = vld [vmem:[#allocation5 + $0x750] sm:$0xff]
    %v367 = vld [vmem:[#allocation5 + $0x758] sm:$0xff]
    %v368 = vld [vmem:[#allocation5 + $0x760] sm:$0xff]
    %v369 = vld [vmem:[#allocation5 + $0x768] sm:$0xff]
    %v370 = vld [vmem:[#allocation5 + $0x770] sm:$0xff]
    %v371 = vld [vmem:[#allocation5 + $0x778] sm:$0xff]
    %v372 = vld [vmem:[#allocation5 + $0x780] sm:$0xff]
    %v373 = vld [vmem:[#allocation5 + $0x788] sm:$0xff]
    %v374 = vld [vmem:[#allocation5 + $0x790] sm:$0xff]
    %v375 = vld [vmem:[#allocation5 + $0x798] sm:$0xff]
    %v376 = vld [vmem:[#allocation5 + $0x7a0] sm:$0xff]
    %v377 = vld [vmem:[#allocation5 + $0x7a8] sm:$0xff]
    %v378 = vld [vmem:[#allocation5 + $0x7b0] sm:$0xff]
    %v379 = vld [vmem:[#allocation5 + $0x7b8] sm:$0xff]
    %v380 = vld [vmem:[#allocation5 + $0x7c0] sm:$0xff]
    %v381 = vld [vmem:[#allocation5 + $0x7c8] sm:$0xff]
    %v382 = vld [vmem:[#allocation5 + $0x7d0] sm:$0xff]
    %v383 = vld [vmem:[#allocation5 + $0x7d8] sm:$0xff]
    %v384 = vld [vmem:[#allocation5 + $0x7e0] sm:$0xff]
    %v385 = vld [vmem:[#allocation5 + $0x7e8] sm:$0xff]
    %v386 = vld [vmem:[#allocation5 + $0x7f0] sm:$0xff]
    %v387 = vld [vmem:[#allocation5 + $0x7f8] sm:$0xff]
    %v388 = vld [vmem:[#allocation5 + $0x800] sm:$0xff]
    %v389 = vld [vmem:[#allocation5 + $0x808] sm:$0xff]
    %v390 = vld [vmem:[#allocation5 + $0x810] sm:$0xff]
    %v391 = vld [vmem:[#allocation5 + $0x818] sm:$0xff]
    %v392 = vld [vmem:[#allocation5 + $0x820] sm:$0xff]
    %v393 = vld [vmem:[#allocation5 + $0x828] sm:$0xff]
    %v394 = vld [vmem:[#allocation5 + $0x830] sm:$0xff]
    %v395 = vld [vmem:[#allocation5 + $0x838] sm:$0xff]
    %v396 = vld [vmem:[#allocation5 + $0x840] sm:$0xff]
    %v397 = vld [vmem:[#allocation5 + $0x848] sm:$0xff]
    %v398 = vld [vmem:[#allocation5 + $0x850] sm:$0xff]
    %v399 = vld [vmem:[#allocation5 + $0x858] sm:$0xff]
    %v400 = vld [vmem:[#allocation5 + $0x860] sm:$0xff]
    %v401 = vld [vmem:[#allocation5 + $0x868] sm:$0xff]
    %v402 = vld [vmem:[#allocation5 + $0x870] sm:$0xff]
    %v403 = vld [vmem:[#allocation5 + $0x878] sm:$0xff]
    %v404 = vld [vmem:[#allocation5 + $0x880] sm:$0xff]
    %v405 = vld [vmem:[#allocation5 + $0x888] sm:$0xff]
    %v406 = vld [vmem:[#allocation5 + $0x890] sm:$0xff]
    %v407 = vld [vmem:[#allocation5 + $0x898] sm:$0xff]
    %v408 = vld [vmem:[#allocation5 + $0x8a0] sm:$0xff]
    %v409 = vld [vmem:[#allocation5 + $0x8a8] sm:$0xff]
    %v410 = vld [vmem:[#allocation5 + $0x8b0] sm:$0xff]
    %v411 = vld [vmem:[#allocation5 + $0x8b8] sm:$0xff]
    %v412 = vld [vmem:[#allocation5 + $0x8c0] sm:$0xff]
    %v413 = vld [vmem:[#allocation5 + $0x8c8] sm:$0xff]
    %v414 = vld [vmem:[#allocation5 + $0x8d0] sm:$0xff]
    %v415 = vld [vmem:[#allocation5 + $0x8d8] sm:$0xff]
    %v416 = vld [vmem:[#allocation5 + $0x8e0] sm:$0xff]
    %v417 = vld [vmem:[#allocation5 + $0x8e8] sm:$0xff]
    %v418 = vld [vmem:[#allocation5 + $0x8f0] sm:$0xff]
    %v419 = vld [vmem:[#allocation5 + $0x8f8] sm:$0xff]
    %v420 = vld [vmem:[#allocation5 + $0x900] sm:$0xff]
    %v421 = vld [vmem:[#allocation5 + $0x908] sm:$0xff]
    %v422 = vld [vmem:[#allocation5 + $0x910] sm:$0xff]
    %v423 = vld [vmem:[#allocation5 + $0x918] sm:$0xff]
    %v424 = vld [vmem:[#allocation5 + $0x920] sm:$0xff]
    %v425 = vld [vmem:[#allocation5 + $0x928] sm:$0xff]
    %v426 = vld [vmem:[#allocation5 + $0x930] sm:$0xff]
    %v427 = vld [vmem:[#allocation5 + $0x938] sm:$0xff]
    %v428 = vld [vmem:[#allocation5 + $0x940] sm:$0xff]
    %v429 = vld [vmem:[#allocation5 + $0x948] sm:$0xff]
    %v430 = vld [vmem:[#allocation5 + $0x950] sm:$0xff]
    %v431 = vld [vmem:[#allocation5 + $0x958] sm:$0xff]
    %v432 = vld [vmem:[#allocation5 + $0x960] sm:$0xff]
    %v433 = vld [vmem:[#allocation5 + $0x968] sm:$0xff]
    %v434 = vld [vmem:[#allocation5 + $0x970] sm:$0xff]
    %v435 = vld [vmem:[#allocation5 + $0x978] sm:$0xff]
    %v436 = vld [vmem:[#allocation5 + $0x980] sm:$0xff]
    %v437 = vld [vmem:[#allocation5 + $0x988] sm:$0xff]
    %v438 = vld [vmem:[#allocation5 + $0x990] sm:$0xff]
    %v439 = vld [vmem:[#allocation5 + $0x998] sm:$0xff]
    %v440 = vld [vmem:[#allocation5 + $0x9a0] sm:$0xff]
    %v441 = vld [vmem:[#allocation5 + $0x9a8] sm:$0xff]
    %v442 = vld [vmem:[#allocation5 + $0x9b0] sm:$0xff]
    %v443 = vld [vmem:[#allocation5 + $0x9b8] sm:$0xff]
    %v444 = vld [vmem:[#allocation5 + $0x9c0] sm:$0xff]
    %v445 = vld [vmem:[#allocation5 + $0x9c8] sm:$0xff]
    %v446 = vld [vmem:[#allocation5 + $0x9d0] sm:$0xff]
    %v447 = vld [vmem:[#allocation5 + $0x9d8] sm:$0xff]
    %v448 = vld [vmem:[#allocation5 + $0x9e0] sm:$0xff]
    %v449 = vld [vmem:[#allocation5 + $0x9e8] sm:$0xff]
    %v450 = vld [vmem:[#allocation5 + $0x9f0] sm:$0xff]
    %v451 = vld [vmem:[#allocation5 + $0x9f8] sm:$0xff]
    %v452 = vld [vmem:[#allocation7] sm:$0xff]
    %v454 = vlaneseq
    %v455 = vshrl.u32 %v454, 7
    %v456 = vsub.s32 0, %v455
    %v457 = vrot.slane %v452, %v456
    %v458 = vlaneseq
    %v459 = vshrl.u32 %v458, 7
    %v460 = vsub.s32 1, %v459
    %v461 = vrot.slane %v452, %v460
    %v462 = vlaneseq
    %v463 = vshrl.u32 %v462, 7
    %v464 = vsub.s32 2, %v463
    %v465 = vrot.slane %v452, %v464
    %v466 = vlaneseq
    %v467 = vshrl.u32 %v466, 7
    %v468 = vsub.s32 3, %v467
    %v469 = vrot.slane %v452, %v468
    %v470 = vlaneseq
    %v471 = vshrl.u32 %v470, 7
    %v472 = vsub.s32 4, %v471
    %v473 = vrot.slane %v452, %v472
    %v474 = vlaneseq
    %v475 = vshrl.u32 %v474, 7
    %v476 = vsub.s32 5, %v475
    %v477 = vrot.slane %v452, %v476
    %v478 = vlaneseq
    %v479 = vshrl.u32 %v478, 7
    %v480 = vsub.s32 6, %v479
    %v481 = vrot.slane %v452, %v480
    %v482 = vlaneseq
    %v483 = vshrl.u32 %v482, 7
    %v484 = vsub.s32 7, %v483
    %v485 = vrot.slane %v452, %v484
    %v814 = vunpack.c.l.b16 %v132
    %v815 = vunpack.c.h.b16 %v132
    %v816 = vunpack.c.l.b16 %v133
    %v817 = vunpack.c.h.b16 %v133
    %v818 = vunpack.c.l.b16 %v134
    %v819 = vunpack.c.h.b16 %v134
    %v820 = vunpack.c.l.b16 %v135
    %v821 = vunpack.c.h.b16 %v135
    %v822 = vunpack.c.l.b16 %v136
    %v823 = vunpack.c.h.b16 %v136
    %v824 = vunpack.c.l.b16 %v137
    %v825 = vunpack.c.h.b16 %v137
    %v826 = vunpack.c.l.b16 %v138
    %v827 = vunpack.c.h.b16 %v138
    %v828 = vunpack.c.l.b16 %v139
    %v829 = vunpack.c.h.b16 %v139
    %v830 = vunpack.c.l.b16 %v140
    %v831 = vunpack.c.h.b16 %v140
    %v832 = vunpack.c.l.b16 %v141
    %v833 = vunpack.c.h.b16 %v141
    %v834 = vunpack.c.l.b16 %v142
    %v835 = vunpack.c.h.b16 %v142
    %v836 = vunpack.c.l.b16 %v143
    %v837 = vunpack.c.h.b16 %v143
    %v838 = vunpack.c.l.b16 %v144
    %v839 = vunpack.c.h.b16 %v144
    %v840 = vunpack.c.l.b16 %v145
    %v841 = vunpack.c.h.b16 %v145
    %v842 = vunpack.c.l.b16 %v146
    %v843 = vunpack.c.h.b16 %v146
    %v844 = vunpack.c.l.b16 %v147
    %v845 = vunpack.c.h.b16 %v147
    %v846 = vunpack.c.l.b16 %v148
    %v847 = vunpack.c.h.b16 %v148
    %v848 = vunpack.c.l.b16 %v149
    %v849 = vunpack.c.h.b16 %v149
    %v850 = vunpack.c.l.b16 %v150
    %v851 = vunpack.c.h.b16 %v150
    %v852 = vunpack.c.l.b16 %v151
    %v853 = vunpack.c.h.b16 %v151
    %v854 = vunpack.c.l.b16 %v152
    %v855 = vunpack.c.h.b16 %v152
    %v856 = vunpack.c.l.b16 %v153
    %v857 = vunpack.c.h.b16 %v153
    %v858 = vunpack.c.l.b16 %v154
    %v859 = vunpack.c.h.b16 %v154
    %v860 = vunpack.c.l.b16 %v155
    %v861 = vunpack.c.h.b16 %v155
    %v862 = vunpack.c.l.b16 %v156
    %v863 = vunpack.c.h.b16 %v156
    %v864 = vunpack.c.l.b16 %v157
    %v865 = vunpack.c.h.b16 %v157
    %v866 = vunpack.c.l.b16 %v158
    %v867 = vunpack.c.h.b16 %v158
    %v868 = vunpack.c.l.b16 %v159
    %v869 = vunpack.c.h.b16 %v159
    %v870 = vunpack.c.l.b16 %v160
    %v871 = vunpack.c.h.b16 %v160
    %v872 = vunpack.c.l.b16 %v161
    %v873 = vunpack.c.h.b16 %v161
    %v874 = vunpack.c.l.b16 %v162
    %v875 = vunpack.c.h.b16 %v162
    %v876 = vunpack.c.l.b16 %v163
    %v877 = vunpack.c.h.b16 %v163
    %v878 = vunpack.c.l.b16 %v164
    %v879 = vunpack.c.h.b16 %v164
    %v880 = vunpack.c.l.b16 %v165
    %v881 = vunpack.c.h.b16 %v165
    %v882 = vunpack.c.l.b16 %v166
    %v883 = vunpack.c.h.b16 %v166
    %v884 = vunpack.c.l.b16 %v167
    %v885 = vunpack.c.h.b16 %v167
    %v886 = vunpack.c.l.b16 %v168
    %v887 = vunpack.c.h.b16 %v168
    %v888 = vunpack.c.l.b16 %v169
    %v889 = vunpack.c.h.b16 %v169
    %v890 = vunpack.c.l.b16 %v170
    %v891 = vunpack.c.h.b16 %v170
    %v892 = vunpack.c.l.b16 %v171
    %v893 = vunpack.c.h.b16 %v171
    %v894 = vunpack.c.l.b16 %v172
    %v895 = vunpack.c.h.b16 %v172
    %v896 = vunpack.c.l.b16 %v173
    %v897 = vunpack.c.h.b16 %v173
    %v898 = vunpack.c.l.b16 %v174
    %v899 = vunpack.c.h.b16 %v174
    %v900 = vunpack.c.l.b16 %v175
    %v901 = vunpack.c.h.b16 %v175
    %v902 = vunpack.c.l.b16 %v176
    %v903 = vunpack.c.h.b16 %v176
    %v904 = vunpack.c.l.b16 %v177
    %v905 = vunpack.c.h.b16 %v177
    %v906 = vunpack.c.l.b16 %v178
    %v907 = vunpack.c.h.b16 %v178
    %v908 = vunpack.c.l.b16 %v179
    %v909 = vunpack.c.h.b16 %v179
    %v910 = vunpack.c.l.b16 %v180
    %v911 = vunpack.c.h.b16 %v180
    %v912 = vunpack.c.l.b16 %v181
    %v913 = vunpack.c.h.b16 %v181
    %v914 = vunpack.c.l.b16 %v182
    %v915 = vunpack.c.h.b16 %v182
    %v916 = vunpack.c.l.b16 %v183
    %v917 = vunpack.c.h.b16 %v183
    %v918 = vunpack.c.l.b16 %v184
    %v919 = vunpack.c.h.b16 %v184
    %v920 = vunpack.c.l.b16 %v185
    %v921 = vunpack.c.h.b16 %v185
    %v922 = vunpack.c.l.b16 %v186
    %v923 = vunpack.c.h.b16 %v186
    %v924 = vunpack.c.l.b16 %v187
    %v925 = vunpack.c.h.b16 %v187
    %v926 = vunpack.c.l.b16 %v188
    %v927 = vunpack.c.h.b16 %v188
    %v928 = vunpack.c.l.b16 %v189
    %v929 = vunpack.c.h.b16 %v189
    %v930 = vunpack.c.l.b16 %v190
    %v931 = vunpack.c.h.b16 %v190
    %v932 = vunpack.c.l.b16 %v191
    %v933 = vunpack.c.h.b16 %v191
    %v934 = vunpack.c.l.b16 %v192
    %v935 = vunpack.c.h.b16 %v192
    %v936 = vunpack.c.l.b16 %v193
    %v937 = vunpack.c.h.b16 %v193
    %v938 = vunpack.c.l.b16 %v194
    %v939 = vunpack.c.h.b16 %v194
    %v940 = vunpack.c.l.b16 %v195
    %v941 = vunpack.c.h.b16 %v195
    %v942 = vunpack.c.l.b16 %v196
    %v943 = vunpack.c.h.b16 %v196
    %v944 = vunpack.c.l.b16 %v197
    %v945 = vunpack.c.h.b16 %v197
    %v946 = vunpack.c.l.b16 %v198
    %v947 = vunpack.c.h.b16 %v198
    %v948 = vunpack.c.l.b16 %v199
    %v949 = vunpack.c.h.b16 %v199
    %v950 = vunpack.c.l.b16 %v200
    %v951 = vunpack.c.h.b16 %v200
    %v952 = vunpack.c.l.b16 %v201
    %v953 = vunpack.c.h.b16 %v201
    %v954 = vunpack.c.l.b16 %v202
    %v955 = vunpack.c.h.b16 %v202
    %v956 = vunpack.c.l.b16 %v203
    %v957 = vunpack.c.h.b16 %v203
    %v958 = vunpack.c.l.b16 %v204
    %v959 = vunpack.c.h.b16 %v204
    %v960 = vunpack.c.l.b16 %v205
    %v961 = vunpack.c.h.b16 %v205
    %v962 = vunpack.c.l.b16 %v206
    %v963 = vunpack.c.h.b16 %v206
    %v964 = vunpack.c.l.b16 %v207
    %v965 = vunpack.c.h.b16 %v207
    %v966 = vunpack.c.l.b16 %v208
    %v967 = vunpack.c.h.b16 %v208
    %v968 = vunpack.c.l.b16 %v209
    %v969 = vunpack.c.h.b16 %v209
    %v970 = vunpack.c.l.b16 %v210
    %v971 = vunpack.c.h.b16 %v210
    %v972 = vunpack.c.l.b16 %v211
    %v973 = vunpack.c.h.b16 %v211
    %v974 = vunpack.c.l.b16 %v212
    %v975 = vunpack.c.h.b16 %v212
    %v976 = vunpack.c.l.b16 %v213
    %v977 = vunpack.c.h.b16 %v213
    %v978 = vunpack.c.l.b16 %v214
    %v979 = vunpack.c.h.b16 %v214
    %v980 = vunpack.c.l.b16 %v215
    %v981 = vunpack.c.h.b16 %v215
    %v982 = vunpack.c.l.b16 %v216
    %v983 = vunpack.c.h.b16 %v216
    %v984 = vunpack.c.l.b16 %v217
    %v985 = vunpack.c.h.b16 %v217
    %v986 = vunpack.c.l.b16 %v218
    %v987 = vunpack.c.h.b16 %v218
    %v988 = vunpack.c.l.b16 %v219
    %v989 = vunpack.c.h.b16 %v219
    %v990 = vunpack.c.l.b16 %v220
    %v991 = vunpack.c.h.b16 %v220
    %v992 = vunpack.c.l.b16 %v221
    %v993 = vunpack.c.h.b16 %v221
    %v994 = vunpack.c.l.b16 %v222
    %v995 = vunpack.c.h.b16 %v222
    %v996 = vunpack.c.l.b16 %v223
    %v997 = vunpack.c.h.b16 %v223
    %v998 = vunpack.c.l.b16 %v224
    %v999 = vunpack.c.h.b16 %v224
    %v1000 = vunpack.c.l.b16 %v225
    %v1001 = vunpack.c.h.b16 %v225
    %v1002 = vunpack.c.l.b16 %v226
    %v1003 = vunpack.c.h.b16 %v226
    %v1004 = vunpack.c.l.b16 %v227
    %v1005 = vunpack.c.h.b16 %v227
    %v1006 = vunpack.c.l.b16 %v228
    %v1007 = vunpack.c.h.b16 %v228
    %v1008 = vunpack.c.l.b16 %v229
    %v1009 = vunpack.c.h.b16 %v229
    %v1010 = vunpack.c.l.b16 %v230
    %v1011 = vunpack.c.h.b16 %v230
    %v1012 = vunpack.c.l.b16 %v231
    %v1013 = vunpack.c.h.b16 %v231
    %v1014 = vunpack.c.l.b16 %v232
    %v1015 = vunpack.c.h.b16 %v232
    %v1016 = vunpack.c.l.b16 %v233
    %v1017 = vunpack.c.h.b16 %v233
    %v1018 = vunpack.c.l.b16 %v234
    %v1019 = vunpack.c.h.b16 %v234
    %v1020 = vunpack.c.l.b16 %v235
    %v1021 = vunpack.c.h.b16 %v235
    %v1022 = vunpack.c.l.b16 %v236
    %v1023 = vunpack.c.h.b16 %v236
    %v1024 = vunpack.c.l.b16 %v237
    %v1025 = vunpack.c.h.b16 %v237
    %v1026 = vunpack.c.l.b16 %v238
    %v1027 = vunpack.c.h.b16 %v238
    %v1028 = vunpack.c.l.b16 %v239
    %v1029 = vunpack.c.h.b16 %v239
    %v1030 = vunpack.c.l.b16 %v240
    %v1031 = vunpack.c.h.b16 %v240
    %v1032 = vunpack.c.l.b16 %v241
    %v1033 = vunpack.c.h.b16 %v241
    %v1034 = vunpack.c.l.b16 %v242
    %v1035 = vunpack.c.h.b16 %v242
    %v1036 = vunpack.c.l.b16 %v243
    %v1037 = vunpack.c.h.b16 %v243
    %v1038 = vunpack.c.l.b16 %v244
    %v1039 = vunpack.c.h.b16 %v244
    %v1040 = vunpack.c.l.b16 %v245
    %v1041 = vunpack.c.h.b16 %v245
    %v1042 = vunpack.c.l.b16 %v246
    %v1043 = vunpack.c.h.b16 %v246
    %v1044 = vunpack.c.l.b16 %v247
    %v1045 = vunpack.c.h.b16 %v247
    %v1046 = vunpack.c.l.b16 %v248
    %v1047 = vunpack.c.h.b16 %v248
    %v1048 = vunpack.c.l.b16 %v249
    %v1049 = vunpack.c.h.b16 %v249
    %v1050 = vunpack.c.l.b16 %v250
    %v1051 = vunpack.c.h.b16 %v250
    %v1052 = vunpack.c.l.b16 %v251
    %v1053 = vunpack.c.h.b16 %v251
    %v1054 = vunpack.c.l.b16 %v252
    %v1055 = vunpack.c.h.b16 %v252
    %v1056 = vunpack.c.l.b16 %v253
    %v1057 = vunpack.c.h.b16 %v253
    %v1058 = vunpack.c.l.b16 %v254
    %v1059 = vunpack.c.h.b16 %v254
    %v1060 = vunpack.c.l.b16 %v255
    %v1061 = vunpack.c.h.b16 %v255
    %v1062 = vunpack.c.l.b16 %v256
    %v1063 = vunpack.c.h.b16 %v256
    %v1064 = vunpack.c.l.b16 %v257
    %v1065 = vunpack.c.h.b16 %v257
    %v1066 = vunpack.c.l.b16 %v258
    %v1067 = vunpack.c.h.b16 %v258
    %v1068 = vunpack.c.l.b16 %v259
    %v1069 = vunpack.c.h.b16 %v259
    %v1070 = vunpack.c.l.b16 %v260
    %v1071 = vunpack.c.h.b16 %v260
    %v1072 = vunpack.c.l.b16 %v261
    %v1073 = vunpack.c.h.b16 %v261
    %v1074 = vunpack.c.l.b16 %v262
    %v1075 = vunpack.c.h.b16 %v262
    %v1076 = vunpack.c.l.b16 %v263
    %v1077 = vunpack.c.h.b16 %v263
    %v1078 = vunpack.c.l.b16 %v264
    %v1079 = vunpack.c.h.b16 %v264
    %v1080 = vunpack.c.l.b16 %v265
    %v1081 = vunpack.c.h.b16 %v265
    %v1082 = vunpack.c.l.b16 %v266
    %v1083 = vunpack.c.h.b16 %v266
    %v1084 = vunpack.c.l.b16 %v267
    %v1085 = vunpack.c.h.b16 %v267
    %v1086 = vunpack.c.l.b16 %v268
    %v1087 = vunpack.c.h.b16 %v268
    %v1088 = vunpack.c.l.b16 %v269
    %v1089 = vunpack.c.h.b16 %v269
    %v1090 = vunpack.c.l.b16 %v270
    %v1091 = vunpack.c.h.b16 %v270
    %v1092 = vunpack.c.l.b16 %v271
    %v1093 = vunpack.c.h.b16 %v271
    %v1094 = vunpack.c.l.b16 %v272
    %v1095 = vunpack.c.h.b16 %v272
    %v1096 = vunpack.c.l.b16 %v273
    %v1097 = vunpack.c.h.b16 %v273
    %v1098 = vunpack.c.l.b16 %v274
    %v1099 = vunpack.c.h.b16 %v274
    %v1100 = vunpack.c.l.b16 %v275
    %v1101 = vunpack.c.h.b16 %v275
    %v1102 = vunpack.c.l.b16 %v276
    %v1103 = vunpack.c.h.b16 %v276
    %v1104 = vunpack.c.l.b16 %v277
    %v1105 = vunpack.c.h.b16 %v277
    %v1106 = vunpack.c.l.b16 %v278
    %v1107 = vunpack.c.h.b16 %v278
    %v1108 = vunpack.c.l.b16 %v279
    %v1109 = vunpack.c.h.b16 %v279
    %v1110 = vunpack.c.l.b16 %v280
    %v1111 = vunpack.c.h.b16 %v280
    %v1112 = vunpack.c.l.b16 %v281
    %v1113 = vunpack.c.h.b16 %v281
    %v1114 = vunpack.c.l.b16 %v282
    %v1115 = vunpack.c.h.b16 %v282
    %v1116 = vunpack.c.l.b16 %v283
    %v1117 = vunpack.c.h.b16 %v283
    %v1118 = vunpack.c.l.b16 %v284
    %v1119 = vunpack.c.h.b16 %v284
    %v1120 = vunpack.c.l.b16 %v285
    %v1121 = vunpack.c.h.b16 %v285
    %v1122 = vunpack.c.l.b16 %v286
    %v1123 = vunpack.c.h.b16 %v286
    %v1124 = vunpack.c.l.b16 %v287
    %v1125 = vunpack.c.h.b16 %v287
    %v1126 = vunpack.c.l.b16 %v288
    %v1127 = vunpack.c.h.b16 %v288
    %v1128 = vunpack.c.l.b16 %v289
    %v1129 = vunpack.c.h.b16 %v289
    %v1130 = vunpack.c.l.b16 %v290
    %v1131 = vunpack.c.h.b16 %v290
    %v1132 = vunpack.c.l.b16 %v291
    %v1133 = vunpack.c.h.b16 %v291
    %v1134 = vunpack.c.l.b16 %v292
    %v1135 = vunpack.c.h.b16 %v292
    %v1136 = vunpack.c.l.b16 %v293
    %v1137 = vunpack.c.h.b16 %v293
    %v1138 = vunpack.c.l.b16 %v294
    %v1139 = vunpack.c.h.b16 %v294
    %v1140 = vunpack.c.l.b16 %v295
    %v1141 = vunpack.c.h.b16 %v295
    %v1142 = vunpack.c.l.b16 %v296
    %v1143 = vunpack.c.h.b16 %v296
    %v1144 = vunpack.c.l.b16 %v297
    %v1145 = vunpack.c.h.b16 %v297
    %v1146 = vunpack.c.l.b16 %v298
    %v1147 = vunpack.c.h.b16 %v298
    %v1148 = vunpack.c.l.b16 %v299
    %v1149 = vunpack.c.h.b16 %v299
    %v1150 = vunpack.c.l.b16 %v300
    %v1151 = vunpack.c.h.b16 %v300
    %v1152 = vunpack.c.l.b16 %v301
    %v1153 = vunpack.c.h.b16 %v301
    %v1154 = vunpack.c.l.b16 %v302
    %v1155 = vunpack.c.h.b16 %v302
    %v1156 = vunpack.c.l.b16 %v303
    %v1157 = vunpack.c.h.b16 %v303
    %v1158 = vunpack.c.l.b16 %v304
    %v1159 = vunpack.c.h.b16 %v304
    %v1160 = vunpack.c.l.b16 %v305
    %v1161 = vunpack.c.h.b16 %v305
    %v1162 = vunpack.c.l.b16 %v306
    %v1163 = vunpack.c.h.b16 %v306
    %v1164 = vunpack.c.l.b16 %v307
    %v1165 = vunpack.c.h.b16 %v307
    %v1166 = vunpack.c.l.b16 %v308
    %v1167 = vunpack.c.h.b16 %v308
    %v1168 = vunpack.c.l.b16 %v309
    %v1169 = vunpack.c.h.b16 %v309
    %v1170 = vunpack.c.l.b16 %v310
    %v1171 = vunpack.c.h.b16 %v310
    %v1172 = vunpack.c.l.b16 %v311
    %v1173 = vunpack.c.h.b16 %v311
    %v1174 = vunpack.c.l.b16 %v312
    %v1175 = vunpack.c.h.b16 %v312
    %v1176 = vunpack.c.l.b16 %v313
    %v1177 = vunpack.c.h.b16 %v313
    %v1178 = vunpack.c.l.b16 %v314
    %v1179 = vunpack.c.h.b16 %v314
    %v1180 = vunpack.c.l.b16 %v315
    %v1181 = vunpack.c.h.b16 %v315
    %v1182 = vunpack.c.l.b16 %v316
    %v1183 = vunpack.c.h.b16 %v316
    %v1184 = vunpack.c.l.b16 %v317
    %v1185 = vunpack.c.h.b16 %v317
    %v1186 = vunpack.c.l.b16 %v318
    %v1187 = vunpack.c.h.b16 %v318
    %v1188 = vunpack.c.l.b16 %v319
    %v1189 = vunpack.c.h.b16 %v319
    %v1190 = vunpack.c.l.b16 %v320
    %v1191 = vunpack.c.h.b16 %v320
    %v1192 = vunpack.c.l.b16 %v321
    %v1193 = vunpack.c.h.b16 %v321
    %v1194 = vunpack.c.l.b16 %v322
    %v1195 = vunpack.c.h.b16 %v322
    %v1196 = vunpack.c.l.b16 %v323
    %v1197 = vunpack.c.h.b16 %v323
    %v1198 = vunpack.c.l.b16 %v324
    %v1199 = vunpack.c.h.b16 %v324
    %v1200 = vunpack.c.l.b16 %v325
    %v1201 = vunpack.c.h.b16 %v325
    %v1202 = vunpack.c.l.b16 %v326
    %v1203 = vunpack.c.h.b16 %v326
    %v1204 = vunpack.c.l.b16 %v327
    %v1205 = vunpack.c.h.b16 %v327
    %v1206 = vunpack.c.l.b16 %v328
    %v1207 = vunpack.c.h.b16 %v328
    %v1208 = vunpack.c.l.b16 %v329
    %v1209 = vunpack.c.h.b16 %v329
    %v1210 = vunpack.c.l.b16 %v330
    %v1211 = vunpack.c.h.b16 %v330
    %v1212 = vunpack.c.l.b16 %v331
    %v1213 = vunpack.c.h.b16 %v331
    %v1214 = vunpack.c.l.b16 %v332
    %v1215 = vunpack.c.h.b16 %v332
    %v1216 = vunpack.c.l.b16 %v333
    %v1217 = vunpack.c.h.b16 %v333
    %v1218 = vunpack.c.l.b16 %v334
    %v1219 = vunpack.c.h.b16 %v334
    %v1220 = vunpack.c.l.b16 %v335
    %v1221 = vunpack.c.h.b16 %v335
    %v1222 = vunpack.c.l.b16 %v336
    %v1223 = vunpack.c.h.b16 %v336
    %v1224 = vunpack.c.l.b16 %v337
    %v1225 = vunpack.c.h.b16 %v337
    %v1226 = vunpack.c.l.b16 %v338
    %v1227 = vunpack.c.h.b16 %v338
    %v1228 = vunpack.c.l.b16 %v339
    %v1229 = vunpack.c.h.b16 %v339
    %v1230 = vunpack.c.l.b16 %v340
    %v1231 = vunpack.c.h.b16 %v340
    %v1232 = vunpack.c.l.b16 %v341
    %v1233 = vunpack.c.h.b16 %v341
    %v1234 = vunpack.c.l.b16 %v342
    %v1235 = vunpack.c.h.b16 %v342
    %v1236 = vunpack.c.l.b16 %v343
    %v1237 = vunpack.c.h.b16 %v343
    %v1238 = vunpack.c.l.b16 %v344
    %v1239 = vunpack.c.h.b16 %v344
    %v1240 = vunpack.c.l.b16 %v345
    %v1241 = vunpack.c.h.b16 %v345
    %v1242 = vunpack.c.l.b16 %v346
    %v1243 = vunpack.c.h.b16 %v346
    %v1244 = vunpack.c.l.b16 %v347
    %v1245 = vunpack.c.h.b16 %v347
    %v1246 = vunpack.c.l.b16 %v348
    %v1247 = vunpack.c.h.b16 %v348
    %v1248 = vunpack.c.l.b16 %v349
    %v1249 = vunpack.c.h.b16 %v349
    %v1250 = vunpack.c.l.b16 %v350
    %v1251 = vunpack.c.h.b16 %v350
    %v1252 = vunpack.c.l.b16 %v351
    %v1253 = vunpack.c.h.b16 %v351
    %v1254 = vunpack.c.l.b16 %v352
    %v1255 = vunpack.c.h.b16 %v352
    %v1256 = vunpack.c.l.b16 %v353
    %v1257 = vunpack.c.h.b16 %v353
    %v1258 = vunpack.c.l.b16 %v354
    %v1259 = vunpack.c.h.b16 %v354
    %v1260 = vunpack.c.l.b16 %v355
    %v1261 = vunpack.c.h.b16 %v355
    %v1262 = vunpack.c.l.b16 %v356
    %v1263 = vunpack.c.h.b16 %v356
    %v1264 = vunpack.c.l.b16 %v357
    %v1265 = vunpack.c.h.b16 %v357
    %v1266 = vunpack.c.l.b16 %v358
    %v1267 = vunpack.c.h.b16 %v358
    %v1268 = vunpack.c.l.b16 %v359
    %v1269 = vunpack.c.h.b16 %v359
    %v1270 = vunpack.c.l.b16 %v360
    %v1271 = vunpack.c.h.b16 %v360
    %v1272 = vunpack.c.l.b16 %v361
    %v1273 = vunpack.c.h.b16 %v361
    %v1274 = vunpack.c.l.b16 %v362
    %v1275 = vunpack.c.h.b16 %v362
    %v1276 = vunpack.c.l.b16 %v363
    %v1277 = vunpack.c.h.b16 %v363
    %v1278 = vunpack.c.l.b16 %v364
    %v1279 = vunpack.c.h.b16 %v364
    %v1280 = vunpack.c.l.b16 %v365
    %v1281 = vunpack.c.h.b16 %v365
    %v1282 = vunpack.c.l.b16 %v366
    %v1283 = vunpack.c.h.b16 %v366
    %v1284 = vunpack.c.l.b16 %v367
    %v1285 = vunpack.c.h.b16 %v367
    %v1286 = vunpack.c.l.b16 %v368
    %v1287 = vunpack.c.h.b16 %v368
    %v1288 = vunpack.c.l.b16 %v369
    %v1289 = vunpack.c.h.b16 %v369
    %v1290 = vunpack.c.l.b16 %v370
    %v1291 = vunpack.c.h.b16 %v370
    %v1292 = vunpack.c.l.b16 %v371
    %v1293 = vunpack.c.h.b16 %v371
    %v1294 = vunpack.c.l.b16 %v372
    %v1295 = vunpack.c.h.b16 %v372
    %v1296 = vunpack.c.l.b16 %v373
    %v1297 = vunpack.c.h.b16 %v373
    %v1298 = vunpack.c.l.b16 %v374
    %v1299 = vunpack.c.h.b16 %v374
    %v1300 = vunpack.c.l.b16 %v375
    %v1301 = vunpack.c.h.b16 %v375
    %v1302 = vunpack.c.l.b16 %v376
    %v1303 = vunpack.c.h.b16 %v376
    %v1304 = vunpack.c.l.b16 %v377
    %v1305 = vunpack.c.h.b16 %v377
    %v1306 = vunpack.c.l.b16 %v378
    %v1307 = vunpack.c.h.b16 %v378
    %v1308 = vunpack.c.l.b16 %v379
    %v1309 = vunpack.c.h.b16 %v379
    %v1310 = vunpack.c.l.b16 %v380
    %v1311 = vunpack.c.h.b16 %v380
    %v1312 = vunpack.c.l.b16 %v381
    %v1313 = vunpack.c.h.b16 %v381
    %v1314 = vunpack.c.l.b16 %v382
    %v1315 = vunpack.c.h.b16 %v382
    %v1316 = vunpack.c.l.b16 %v383
    %v1317 = vunpack.c.h.b16 %v383
    %v1318 = vunpack.c.l.b16 %v384
    %v1319 = vunpack.c.h.b16 %v384
    %v1320 = vunpack.c.l.b16 %v385
    %v1321 = vunpack.c.h.b16 %v385
    %v1322 = vunpack.c.l.b16 %v386
    %v1323 = vunpack.c.h.b16 %v386
    %v1324 = vunpack.c.l.b16 %v387
    %v1325 = vunpack.c.h.b16 %v387
    %v1326 = vunpack.c.l.b16 %v388
    %v1327 = vunpack.c.h.b16 %v388
    %v1328 = vunpack.c.l.b16 %v389
    %v1329 = vunpack.c.h.b16 %v389
    %v1330 = vunpack.c.l.b16 %v390
    %v1331 = vunpack.c.h.b16 %v390
    %v1332 = vunpack.c.l.b16 %v391
    %v1333 = vunpack.c.h.b16 %v391
    %v1334 = vunpack.c.l.b16 %v392
    %v1335 = vunpack.c.h.b16 %v392
    %v1336 = vunpack.c.l.b16 %v393
    %v1337 = vunpack.c.h.b16 %v393
    %v1338 = vunpack.c.l.b16 %v394
    %v1339 = vunpack.c.h.b16 %v394
    %v1340 = vunpack.c.l.b16 %v395
    %v1341 = vunpack.c.h.b16 %v395
    %v1342 = vunpack.c.l.b16 %v396
    %v1343 = vunpack.c.h.b16 %v396
    %v1344 = vunpack.c.l.b16 %v397
    %v1345 = vunpack.c.h.b16 %v397
    %v1346 = vunpack.c.l.b16 %v398
    %v1347 = vunpack.c.h.b16 %v398
    %v1348 = vunpack.c.l.b16 %v399
    %v1349 = vunpack.c.h.b16 %v399
    %v1350 = vunpack.c.l.b16 %v400
    %v1351 = vunpack.c.h.b16 %v400
    %v1352 = vunpack.c.l.b16 %v401
    %v1353 = vunpack.c.h.b16 %v401
    %v1354 = vunpack.c.l.b16 %v402
    %v1355 = vunpack.c.h.b16 %v402
    %v1356 = vunpack.c.l.b16 %v403
    %v1357 = vunpack.c.h.b16 %v403
    %v1358 = vunpack.c.l.b16 %v404
    %v1359 = vunpack.c.h.b16 %v404
    %v1360 = vunpack.c.l.b16 %v405
    %v1361 = vunpack.c.h.b16 %v405
    %v1362 = vunpack.c.l.b16 %v406
    %v1363 = vunpack.c.h.b16 %v406
    %v1364 = vunpack.c.l.b16 %v407
    %v1365 = vunpack.c.h.b16 %v407
    %v1366 = vunpack.c.l.b16 %v408
    %v1367 = vunpack.c.h.b16 %v408
    %v1368 = vunpack.c.l.b16 %v409
    %v1369 = vunpack.c.h.b16 %v409
    %v1370 = vunpack.c.l.b16 %v410
    %v1371 = vunpack.c.h.b16 %v410
    %v1372 = vunpack.c.l.b16 %v411
    %v1373 = vunpack.c.h.b16 %v411
    %v1374 = vunpack.c.l.b16 %v412
    %v1375 = vunpack.c.h.b16 %v412
    %v1376 = vunpack.c.l.b16 %v413
    %v1377 = vunpack.c.h.b16 %v413
    %v1378 = vunpack.c.l.b16 %v414
    %v1379 = vunpack.c.h.b16 %v414
    %v1380 = vunpack.c.l.b16 %v415
    %v1381 = vunpack.c.h.b16 %v415
    %v1382 = vunpack.c.l.b16 %v416
    %v1383 = vunpack.c.h.b16 %v416
    %v1384 = vunpack.c.l.b16 %v417
    %v1385 = vunpack.c.h.b16 %v417
    %v1386 = vunpack.c.l.b16 %v418
    %v1387 = vunpack.c.h.b16 %v418
    %v1388 = vunpack.c.l.b16 %v419
    %v1389 = vunpack.c.h.b16 %v419
    %v1390 = vunpack.c.l.b16 %v420
    %v1391 = vunpack.c.h.b16 %v420
    %v1392 = vunpack.c.l.b16 %v421
    %v1393 = vunpack.c.h.b16 %v421
    %v1394 = vunpack.c.l.b16 %v422
    %v1395 = vunpack.c.h.b16 %v422
    %v1396 = vunpack.c.l.b16 %v423
    %v1397 = vunpack.c.h.b16 %v423
    %v1398 = vunpack.c.l.b16 %v424
    %v1399 = vunpack.c.h.b16 %v424
    %v1400 = vunpack.c.l.b16 %v425
    %v1401 = vunpack.c.h.b16 %v425
    %v1402 = vunpack.c.l.b16 %v426
    %v1403 = vunpack.c.h.b16 %v426
    %v1404 = vunpack.c.l.b16 %v427
    %v1405 = vunpack.c.h.b16 %v427
    %v1406 = vunpack.c.l.b16 %v428
    %v1407 = vunpack.c.h.b16 %v428
    %v1408 = vunpack.c.l.b16 %v429
    %v1409 = vunpack.c.h.b16 %v429
    %v1410 = vunpack.c.l.b16 %v430
    %v1411 = vunpack.c.h.b16 %v430
    %v1412 = vunpack.c.l.b16 %v431
    %v1413 = vunpack.c.h.b16 %v431
    %v1414 = vunpack.c.l.b16 %v432
    %v1415 = vunpack.c.h.b16 %v432
    %v1416 = vunpack.c.l.b16 %v433
    %v1417 = vunpack.c.h.b16 %v433
    %v1418 = vunpack.c.l.b16 %v434
    %v1419 = vunpack.c.h.b16 %v434
    %v1420 = vunpack.c.l.b16 %v435
    %v1421 = vunpack.c.h.b16 %v435
    %v1422 = vunpack.c.l.b16 %v436
    %v1423 = vunpack.c.h.b16 %v436
    %v1424 = vunpack.c.l.b16 %v437
    %v1425 = vunpack.c.h.b16 %v437
    %v1426 = vunpack.c.l.b16 %v438
    %v1427 = vunpack.c.h.b16 %v438
    %v1428 = vunpack.c.l.b16 %v439
    %v1429 = vunpack.c.h.b16 %v439
    %v1430 = vunpack.c.l.b16 %v440
    %v1431 = vunpack.c.h.b16 %v440
    %v1432 = vunpack.c.l.b16 %v441
    %v1433 = vunpack.c.h.b16 %v441
    %v1434 = vunpack.c.l.b16 %v442
    %v1435 = vunpack.c.h.b16 %v442
    %v1436 = vunpack.c.l.b16 %v443
    %v1437 = vunpack.c.h.b16 %v443
    %v1438 = vunpack.c.l.b16 %v444
    %v1439 = vunpack.c.h.b16 %v444
    %v1440 = vunpack.c.l.b16 %v445
    %v1441 = vunpack.c.h.b16 %v445
    %v1442 = vunpack.c.l.b16 %v446
    %v1443 = vunpack.c.h.b16 %v446
    %v1444 = vunpack.c.l.b16 %v447
    %v1445 = vunpack.c.h.b16 %v447
    %v1446 = vunpack.c.l.b16 %v448
    %v1447 = vunpack.c.h.b16 %v448
    %v1448 = vunpack.c.l.b16 %v449
    %v1449 = vunpack.c.h.b16 %v449
    %v1450 = vunpack.c.l.b16 %v450
    %v1451 = vunpack.c.h.b16 %v450
    %v1452 = vunpack.c.l.b16 %v451
    %v1453 = vunpack.c.h.b16 %v451
    %v1454 = vpack.c.b16 %v822, %v814
    %v1455 = vpack.c.b16 %v823, %v815
    %v1456 = vpack.c.b16 %v824, %v816
    %v1457 = vpack.c.b16 %v825, %v817
    %v1458 = vpack.c.b16 %v826, %v818
    %v1459 = vpack.c.b16 %v827, %v819
    %v1460 = vpack.c.b16 %v828, %v820
    %v1461 = vpack.c.b16 %v829, %v821
    %v1462 = vpack.c.b16 %v838, %v830
    %v1463 = vpack.c.b16 %v839, %v831
    %v1464 = vpack.c.b16 %v840, %v832
    %v1465 = vpack.c.b16 %v841, %v833
    %v1466 = vpack.c.b16 %v842, %v834
    %v1467 = vpack.c.b16 %v843, %v835
    %v1468 = vpack.c.b16 %v844, %v836
    %v1469 = vpack.c.b16 %v845, %v837
    %v1470 = vpack.c.b16 %v854, %v846
    %v1471 = vpack.c.b16 %v855, %v847
    %v1472 = vpack.c.b16 %v856, %v848
    %v1473 = vpack.c.b16 %v857, %v849
    %v1474 = vpack.c.b16 %v858, %v850
    %v1475 = vpack.c.b16 %v859, %v851
    %v1476 = vpack.c.b16 %v860, %v852
    %v1477 = vpack.c.b16 %v861, %v853
    %v1478 = vpack.c.b16 %v870, %v862
    %v1479 = vpack.c.b16 %v871, %v863
    %v1480 = vpack.c.b16 %v872, %v864
    %v1481 = vpack.c.b16 %v873, %v865
    %v1482 = vpack.c.b16 %v874, %v866
    %v1483 = vpack.c.b16 %v875, %v867
    %v1484 = vpack.c.b16 %v876, %v868
    %v1485 = vpack.c.b16 %v877, %v869
    %v1486 = vpack.c.b16 %v886, %v878
    %v1487 = vpack.c.b16 %v887, %v879
    %v1488 = vpack.c.b16 %v888, %v880
    %v1489 = vpack.c.b16 %v889, %v881
    %v1490 = vpack.c.b16 %v890, %v882
    %v1491 = vpack.c.b16 %v891, %v883
    %v1492 = vpack.c.b16 %v892, %v884
    %v1493 = vpack.c.b16 %v893, %v885
    %v1494 = vpack.c.b16 %v902, %v894
    %v1495 = vpack.c.b16 %v903, %v895
    %v1496 = vpack.c.b16 %v904, %v896
    %v1497 = vpack.c.b16 %v905, %v897
    %v1498 = vpack.c.b16 %v906, %v898
    %v1499 = vpack.c.b16 %v907, %v899
    %v1500 = vpack.c.b16 %v908, %v900
    %v1501 = vpack.c.b16 %v909, %v901
    %v1502 = vpack.c.b16 %v918, %v910
    %v1503 = vpack.c.b16 %v919, %v911
    %v1504 = vpack.c.b16 %v920, %v912
    %v1505 = vpack.c.b16 %v921, %v913
    %v1506 = vpack.c.b16 %v922, %v914
    %v1507 = vpack.c.b16 %v923, %v915
    %v1508 = vpack.c.b16 %v924, %v916
    %v1509 = vpack.c.b16 %v925, %v917
    %v1510 = vpack.c.b16 %v934, %v926
    %v1511 = vpack.c.b16 %v935, %v927
    %v1512 = vpack.c.b16 %v936, %v928
    %v1513 = vpack.c.b16 %v937, %v929
    %v1514 = vpack.c.b16 %v938, %v930
    %v1515 = vpack.c.b16 %v939, %v931
    %v1516 = vpack.c.b16 %v940, %v932
    %v1517 = vpack.c.b16 %v941, %v933
    %v1518 = vpack.c.b16 %v950, %v942
    %v1519 = vpack.c.b16 %v951, %v943
    %v1520 = vpack.c.b16 %v952, %v944
    %v1521 = vpack.c.b16 %v953, %v945
    %v1522 = vpack.c.b16 %v954, %v946
    %v1523 = vpack.c.b16 %v955, %v947
    %v1524 = vpack.c.b16 %v956, %v948
    %v1525 = vpack.c.b16 %v957, %v949
    %v1526 = vpack.c.b16 %v966, %v958
    %v1527 = vpack.c.b16 %v967, %v959
    %v1528 = vpack.c.b16 %v968, %v960
    %v1529 = vpack.c.b16 %v969, %v961
    %v1530 = vpack.c.b16 %v970, %v962
    %v1531 = vpack.c.b16 %v971, %v963
    %v1532 = vpack.c.b16 %v972, %v964
    %v1533 = vpack.c.b16 %v973, %v965
    %v1534 = vpack.c.b16 %v982, %v974
    %v1535 = vpack.c.b16 %v983, %v975
    %v1536 = vpack.c.b16 %v984, %v976
    %v1537 = vpack.c.b16 %v985, %v977
    %v1538 = vpack.c.b16 %v986, %v978
    %v1539 = vpack.c.b16 %v987, %v979
    %v1540 = vpack.c.b16 %v988, %v980
    %v1541 = vpack.c.b16 %v989, %v981
    %v1542 = vpack.c.b16 %v998, %v990
    %v1543 = vpack.c.b16 %v999, %v991
    %v1544 = vpack.c.b16 %v1000, %v992
    %v1545 = vpack.c.b16 %v1001, %v993
    %v1546 = vpack.c.b16 %v1002, %v994
    %v1547 = vpack.c.b16 %v1003, %v995
    %v1548 = vpack.c.b16 %v1004, %v996
    %v1549 = vpack.c.b16 %v1005, %v997
    %v1550 = vpack.c.b16 %v1014, %v1006
    %v1551 = vpack.c.b16 %v1015, %v1007
    %v1552 = vpack.c.b16 %v1016, %v1008
    %v1553 = vpack.c.b16 %v1017, %v1009
    %v1554 = vpack.c.b16 %v1018, %v1010
    %v1555 = vpack.c.b16 %v1019, %v1011
    %v1556 = vpack.c.b16 %v1020, %v1012
    %v1557 = vpack.c.b16 %v1021, %v1013
    %v1558 = vpack.c.b16 %v1030, %v1022
    %v1559 = vpack.c.b16 %v1031, %v1023
    %v1560 = vpack.c.b16 %v1032, %v1024
    %v1561 = vpack.c.b16 %v1033, %v1025
    %v1562 = vpack.c.b16 %v1034, %v1026
    %v1563 = vpack.c.b16 %v1035, %v1027
    %v1564 = vpack.c.b16 %v1036, %v1028
    %v1565 = vpack.c.b16 %v1037, %v1029
    %v1566 = vpack.c.b16 %v1046, %v1038
    %v1567 = vpack.c.b16 %v1047, %v1039
    %v1568 = vpack.c.b16 %v1048, %v1040
    %v1569 = vpack.c.b16 %v1049, %v1041
    %v1570 = vpack.c.b16 %v1050, %v1042
    %v1571 = vpack.c.b16 %v1051, %v1043
    %v1572 = vpack.c.b16 %v1052, %v1044
    %v1573 = vpack.c.b16 %v1053, %v1045
    %v1574 = vpack.c.b16 %v1062, %v1054
    %v1575 = vpack.c.b16 %v1063, %v1055
    %v1576 = vpack.c.b16 %v1064, %v1056
    %v1577 = vpack.c.b16 %v1065, %v1057
    %v1578 = vpack.c.b16 %v1066, %v1058
    %v1579 = vpack.c.b16 %v1067, %v1059
    %v1580 = vpack.c.b16 %v1068, %v1060
    %v1581 = vpack.c.b16 %v1069, %v1061
    %v1582 = vpack.c.b16 %v1078, %v1070
    %v1583 = vpack.c.b16 %v1079, %v1071
    %v1584 = vpack.c.b16 %v1080, %v1072
    %v1585 = vpack.c.b16 %v1081, %v1073
    %v1586 = vpack.c.b16 %v1082, %v1074
    %v1587 = vpack.c.b16 %v1083, %v1075
    %v1588 = vpack.c.b16 %v1084, %v1076
    %v1589 = vpack.c.b16 %v1085, %v1077
    %v1590 = vpack.c.b16 %v1094, %v1086
    %v1591 = vpack.c.b16 %v1095, %v1087
    %v1592 = vpack.c.b16 %v1096, %v1088
    %v1593 = vpack.c.b16 %v1097, %v1089
    %v1594 = vpack.c.b16 %v1098, %v1090
    %v1595 = vpack.c.b16 %v1099, %v1091
    %v1596 = vpack.c.b16 %v1100, %v1092
    %v1597 = vpack.c.b16 %v1101, %v1093
    %v1598 = vpack.c.b16 %v1110, %v1102
    %v1599 = vpack.c.b16 %v1111, %v1103
    %v1600 = vpack.c.b16 %v1112, %v1104
    %v1601 = vpack.c.b16 %v1113, %v1105
    %v1602 = vpack.c.b16 %v1114, %v1106
    %v1603 = vpack.c.b16 %v1115, %v1107
    %v1604 = vpack.c.b16 %v1116, %v1108
    %v1605 = vpack.c.b16 %v1117, %v1109
    %v1606 = vpack.c.b16 %v1126, %v1118
    %v1607 = vpack.c.b16 %v1127, %v1119
    %v1608 = vpack.c.b16 %v1128, %v1120
    %v1609 = vpack.c.b16 %v1129, %v1121
    %v1610 = vpack.c.b16 %v1130, %v1122
    %v1611 = vpack.c.b16 %v1131, %v1123
    %v1612 = vpack.c.b16 %v1132, %v1124
    %v1613 = vpack.c.b16 %v1133, %v1125
    %v1614 = vpack.c.b16 %v1142, %v1134
    %v1615 = vpack.c.b16 %v1143, %v1135
    %v1616 = vpack.c.b16 %v1144, %v1136
    %v1617 = vpack.c.b16 %v1145, %v1137
    %v1618 = vpack.c.b16 %v1146, %v1138
    %v1619 = vpack.c.b16 %v1147, %v1139
    %v1620 = vpack.c.b16 %v1148, %v1140
    %v1621 = vpack.c.b16 %v1149, %v1141
    %v1622 = vpack.c.b16 %v1158, %v1150
    %v1623 = vpack.c.b16 %v1159, %v1151
    %v1624 = vpack.c.b16 %v1160, %v1152
    %v1625 = vpack.c.b16 %v1161, %v1153
    %v1626 = vpack.c.b16 %v1162, %v1154
    %v1627 = vpack.c.b16 %v1163, %v1155
    %v1628 = vpack.c.b16 %v1164, %v1156
    %v1629 = vpack.c.b16 %v1165, %v1157
    %v1630 = vpack.c.b16 %v1174, %v1166
    %v1631 = vpack.c.b16 %v1175, %v1167
    %v1632 = vpack.c.b16 %v1176, %v1168
    %v1633 = vpack.c.b16 %v1177, %v1169
    %v1634 = vpack.c.b16 %v1178, %v1170
    %v1635 = vpack.c.b16 %v1179, %v1171
    %v1636 = vpack.c.b16 %v1180, %v1172
    %v1637 = vpack.c.b16 %v1181, %v1173
    %v1638 = vpack.c.b16 %v1190, %v1182
    %v1639 = vpack.c.b16 %v1191, %v1183
    %v1640 = vpack.c.b16 %v1192, %v1184
    %v1641 = vpack.c.b16 %v1193, %v1185
    %v1642 = vpack.c.b16 %v1194, %v1186
    %v1643 = vpack.c.b16 %v1195, %v1187
    %v1644 = vpack.c.b16 %v1196, %v1188
    %v1645 = vpack.c.b16 %v1197, %v1189
    %v1646 = vpack.c.b16 %v1206, %v1198
    %v1647 = vpack.c.b16 %v1207, %v1199
    %v1648 = vpack.c.b16 %v1208, %v1200
    %v1649 = vpack.c.b16 %v1209, %v1201
    %v1650 = vpack.c.b16 %v1210, %v1202
    %v1651 = vpack.c.b16 %v1211, %v1203
    %v1652 = vpack.c.b16 %v1212, %v1204
    %v1653 = vpack.c.b16 %v1213, %v1205
    %v1654 = vpack.c.b16 %v1222, %v1214
    %v1655 = vpack.c.b16 %v1223, %v1215
    %v1656 = vpack.c.b16 %v1224, %v1216
    %v1657 = vpack.c.b16 %v1225, %v1217
    %v1658 = vpack.c.b16 %v1226, %v1218
    %v1659 = vpack.c.b16 %v1227, %v1219
    %v1660 = vpack.c.b16 %v1228, %v1220
    %v1661 = vpack.c.b16 %v1229, %v1221
    %v1662 = vpack.c.b16 %v1238, %v1230
    %v1663 = vpack.c.b16 %v1239, %v1231
    %v1664 = vpack.c.b16 %v1240, %v1232
    %v1665 = vpack.c.b16 %v1241, %v1233
    %v1666 = vpack.c.b16 %v1242, %v1234
    %v1667 = vpack.c.b16 %v1243, %v1235
    %v1668 = vpack.c.b16 %v1244, %v1236
    %v1669 = vpack.c.b16 %v1245, %v1237
    %v1670 = vpack.c.b16 %v1254, %v1246
    %v1671 = vpack.c.b16 %v1255, %v1247
    %v1672 = vpack.c.b16 %v1256, %v1248
    %v1673 = vpack.c.b16 %v1257, %v1249
    %v1674 = vpack.c.b16 %v1258, %v1250
    %v1675 = vpack.c.b16 %v1259, %v1251
    %v1676 = vpack.c.b16 %v1260, %v1252
    %v1677 = vpack.c.b16 %v1261, %v1253
    %v1678 = vpack.c.b16 %v1270, %v1262
    %v1679 = vpack.c.b16 %v1271, %v1263
    %v1680 = vpack.c.b16 %v1272, %v1264
    %v1681 = vpack.c.b16 %v1273, %v1265
    %v1682 = vpack.c.b16 %v1274, %v1266
    %v1683 = vpack.c.b16 %v1275, %v1267
    %v1684 = vpack.c.b16 %v1276, %v1268
    %v1685 = vpack.c.b16 %v1277, %v1269
    %v1686 = vpack.c.b16 %v1286, %v1278
    %v1687 = vpack.c.b16 %v1287, %v1279
    %v1688 = vpack.c.b16 %v1288, %v1280
    %v1689 = vpack.c.b16 %v1289, %v1281
    %v1690 = vpack.c.b16 %v1290, %v1282
    %v1691 = vpack.c.b16 %v1291, %v1283
    %v1692 = vpack.c.b16 %v1292, %v1284
    %v1693 = vpack.c.b16 %v1293, %v1285
    %v1694 = vpack.c.b16 %v1302, %v1294
    %v1695 = vpack.c.b16 %v1303, %v1295
    %v1696 = vpack.c.b16 %v1304, %v1296
    %v1697 = vpack.c.b16 %v1305, %v1297
    %v1698 = vpack.c.b16 %v1306, %v1298
    %v1699 = vpack.c.b16 %v1307, %v1299
    %v1700 = vpack.c.b16 %v1308, %v1300
    %v1701 = vpack.c.b16 %v1309, %v1301
    %v1702 = vpack.c.b16 %v1318, %v1310
    %v1703 = vpack.c.b16 %v1319, %v1311
    %v1704 = vpack.c.b16 %v1320, %v1312
    %v1705 = vpack.c.b16 %v1321, %v1313
    %v1706 = vpack.c.b16 %v1322, %v1314
    %v1707 = vpack.c.b16 %v1323, %v1315
    %v1708 = vpack.c.b16 %v1324, %v1316
    %v1709 = vpack.c.b16 %v1325, %v1317
    %v1710 = vpack.c.b16 %v1334, %v1326
    %v1711 = vpack.c.b16 %v1335, %v1327
    %v1712 = vpack.c.b16 %v1336, %v1328
    %v1713 = vpack.c.b16 %v1337, %v1329
    %v1714 = vpack.c.b16 %v1338, %v1330
    %v1715 = vpack.c.b16 %v1339, %v1331
    %v1716 = vpack.c.b16 %v1340, %v1332
    %v1717 = vpack.c.b16 %v1341, %v1333
    %v1718 = vpack.c.b16 %v1350, %v1342
    %v1719 = vpack.c.b16 %v1351, %v1343
    %v1720 = vpack.c.b16 %v1352, %v1344
    %v1721 = vpack.c.b16 %v1353, %v1345
    %v1722 = vpack.c.b16 %v1354, %v1346
    %v1723 = vpack.c.b16 %v1355, %v1347
    %v1724 = vpack.c.b16 %v1356, %v1348
    %v1725 = vpack.c.b16 %v1357, %v1349
    %v1726 = vpack.c.b16 %v1366, %v1358
    %v1727 = vpack.c.b16 %v1367, %v1359
    %v1728 = vpack.c.b16 %v1368, %v1360
    %v1729 = vpack.c.b16 %v1369, %v1361
    %v1730 = vpack.c.b16 %v1370, %v1362
    %v1731 = vpack.c.b16 %v1371, %v1363
    %v1732 = vpack.c.b16 %v1372, %v1364
    %v1733 = vpack.c.b16 %v1373, %v1365
    %v1734 = vpack.c.b16 %v1382, %v1374
    %v1735 = vpack.c.b16 %v1383, %v1375
    %v1736 = vpack.c.b16 %v1384, %v1376
    %v1737 = vpack.c.b16 %v1385, %v1377
    %v1738 = vpack.c.b16 %v1386, %v1378
    %v1739 = vpack.c.b16 %v1387, %v1379
    %v1740 = vpack.c.b16 %v1388, %v1380
    %v1741 = vpack.c.b16 %v1389, %v1381
    %v1742 = vpack.c.b16 %v1398, %v1390
    %v1743 = vpack.c.b16 %v1399, %v1391
    %v1744 = vpack.c.b16 %v1400, %v1392
    %v1745 = vpack.c.b16 %v1401, %v1393
    %v1746 = vpack.c.b16 %v1402, %v1394
    %v1747 = vpack.c.b16 %v1403, %v1395
    %v1748 = vpack.c.b16 %v1404, %v1396
    %v1749 = vpack.c.b16 %v1405, %v1397
    %v1750 = vpack.c.b16 %v1414, %v1406
    %v1751 = vpack.c.b16 %v1415, %v1407
    %v1752 = vpack.c.b16 %v1416, %v1408
    %v1753 = vpack.c.b16 %v1417, %v1409
    %v1754 = vpack.c.b16 %v1418, %v1410
    %v1755 = vpack.c.b16 %v1419, %v1411
    %v1756 = vpack.c.b16 %v1420, %v1412
    %v1757 = vpack.c.b16 %v1421, %v1413
    %v1758 = vpack.c.b16 %v1430, %v1422
    %v1759 = vpack.c.b16 %v1431, %v1423
    %v1760 = vpack.c.b16 %v1432, %v1424
    %v1761 = vpack.c.b16 %v1433, %v1425
    %v1762 = vpack.c.b16 %v1434, %v1426
    %v1763 = vpack.c.b16 %v1435, %v1427
    %v1764 = vpack.c.b16 %v1436, %v1428
    %v1765 = vpack.c.b16 %v1437, %v1429
    %v1766 = vpack.c.b16 %v1446, %v1438
    %v1767 = vpack.c.b16 %v1447, %v1439
    %v1768 = vpack.c.b16 %v1448, %v1440
    %v1769 = vpack.c.b16 %v1449, %v1441
    %v1770 = vpack.c.b16 %v1450, %v1442
    %v1771 = vpack.c.b16 %v1451, %v1443
    %v1772 = vpack.c.b16 %v1452, %v1444
    %v1773 = vpack.c.b16 %v1453, %v1445
    %2094 = vmatprep.subr.bf16.mxu0 %v1511
    %2095 = vmatpush1.bf16.msra.mxu0 %v1510
    %2096 = vmatprep.subr.bf16.mxu0 %v1503
    %2097 = vmatpush1.bf16.msra.mxu0 %v1502
    %2098 = vmatprep.subr.bf16.mxu0 %v1495
    %2099 = vmatpush1.bf16.msra.mxu0 %v1494
    %2100 = vmatprep.subr.bf16.mxu0 %v1487
    %2101 = vmatpush1.bf16.msra.mxu0 %v1486
    %2102 = vmatprep.subr.bf16.mxu0 %v1479
    %2103 = vmatpush1.bf16.msra.mxu0 %v1478
    %2104 = vmatprep.subr.bf16.mxu0 %v1471
    %2105 = vmatpush1.bf16.msra.mxu0 %v1470
    %2106 = vmatprep.subr.bf16.mxu0 %v1463
    %2107 = vmatpush1.bf16.msra.mxu0 %v1462
    %2108 = vmatprep.subr.bf16.mxu0 %v1455
    %2109 = vmatpush1.bf16.msra.mxu0 %v1454
    %2110 = vmatprep.subr.bf16.mxu0 %v1575
    %2111 = vmatpush2.bf16.msra.mxu0 %v1574
    %2112 = vmatprep.subr.bf16.mxu0 %v1567
    %2113 = vmatpush2.bf16.msra.mxu0 %v1566
    %2114 = vmatprep.subr.bf16.mxu0 %v1559
    %2115 = vmatpush2.bf16.msra.mxu0 %v1558
    %2116 = vmatprep.subr.bf16.mxu0 %v1551
    %2117 = vmatpush2.bf16.msra.mxu0 %v1550
    %2118 = vmatprep.subr.bf16.mxu0 %v1543
    %2119 = vmatpush2.bf16.msra.mxu0 %v1542
    %2120 = vmatprep.subr.bf16.mxu0 %v1535
    %2121 = vmatpush2.bf16.msra.mxu0 %v1534
    %2122 = vmatprep.subr.bf16.mxu0 %v1527
    %2123 = vmatpush2.bf16.msra.mxu0 %v1526
    %2124 = vmatprep.subr.bf16.mxu0 %v1519
    %2125 = vmatpush2.bf16.msra.mxu0 %v1518
    %2126 = vmatprep.mubr.bf16.mxu0 %v128
    %2127 = vmatmul.mubr.bf16.gmra.mxu0 %v127
    %v2128 = vpop.f32.mrf.mxu0
    %v2129 = vadd.f32 %v457, %v2128
    %v2130 = vpop.f32.mrf.mxu0
    %v2131 = vadd.f32 %v461, %v2130
    %v2132 = vpop.f32.mrf.mxu0
    %v2133 = vadd.f32 %v457, %v2132
    %v2134 = vpop.f32.mrf.mxu0
    %v2135 = vadd.f32 %v461, %v2134
    %2136 = vdwg.mxu0
    %2137 = vmatprep.subr.bf16.mxu0 %v1639
    %2138 = vmatpush1.bf16.msra.mxu0 %v1638
    %2139 = vmatprep.subr.bf16.mxu0 %v1631
    %2140 = vmatpush1.bf16.msra.mxu0 %v1630
    %2141 = vmatprep.subr.bf16.mxu0 %v1623
    %2142 = vmatpush1.bf16.msra.mxu0 %v1622
    %2143 = vmatprep.subr.bf16.mxu0 %v1615
    %2144 = vmatpush1.bf16.msra.mxu0 %v1614
    %2145 = vmatprep.subr.bf16.mxu0 %v1607
    %2146 = vmatpush1.bf16.msra.mxu0 %v1606
    %2147 = vmatprep.subr.bf16.mxu0 %v1599
    %2148 = vmatpush1.bf16.msra.mxu0 %v1598
    %2149 = vmatprep.subr.bf16.mxu0 %v1591
    %2150 = vmatpush1.bf16.msra.mxu0 %v1590
    %2151 = vmatprep.subr.bf16.mxu0 %v1583
    %2152 = vmatpush1.bf16.msra.mxu0 %v1582
    %2153 = vmatprep.subr.bf16.mxu0 %v1703
    %2154 = vmatpush2.bf16.msra.mxu0 %v1702
    %2155 = vmatprep.subr.bf16.mxu0 %v1695
    %2156 = vmatpush2.bf16.msra.mxu0 %v1694
    %2157 = vmatprep.subr.bf16.mxu0 %v1687
    %2158 = vmatpush2.bf16.msra.mxu0 %v1686
    %2159 = vmatprep.subr.bf16.mxu0 %v1679
    %2160 = vmatpush2.bf16.msra.mxu0 %v1678
    %2161 = vmatprep.subr.bf16.mxu0 %v1671
    %2162 = vmatpush2.bf16.msra.mxu0 %v1670
    %2163 = vmatprep.subr.bf16.mxu0 %v1663
    %2164 = vmatpush2.bf16.msra.mxu0 %v1662
    %2165 = vmatprep.subr.bf16.mxu0 %v1655
    %2166 = vmatpush2.bf16.msra.mxu0 %v1654
    %2167 = vmatprep.subr.bf16.mxu0 %v1647
    %2168 = vmatpush2.bf16.msra.mxu0 %v1646
    %2169 = vmatprep.mubr.bf16.mxu0 %v130
    %2170 = vmatmul.mubr.bf16.gmra.mxu0 %v129
    %v2171 = vpop.f32.mrf.mxu0
    %v2172 = vadd.f32 %v2129, %v2171
    %v2173 = vpop.f32.mrf.mxu0
    %v2174 = vadd.f32 %v2131, %v2173
    %v2175 = vpop.f32.mrf.mxu0
    %v2176 = vadd.f32 %v2133, %v2175
    %v2177 = vpop.f32.mrf.mxu0
    %v2178 = vadd.f32 %v2135, %v2177
    %2179 = vdwg.mxu0
    %2180 = vmatprep.subr.bf16.mxu0 %v1767
    %2181 = vmatpush1.bf16.msra.mxu0 %v1766
    %2182 = vmatprep.subr.bf16.mxu0 %v1759
    %2183 = vmatpush1.bf16.msra.mxu0 %v1758
    %2184 = vmatprep.subr.bf16.mxu0 %v1751
    %2185 = vmatpush1.bf16.msra.mxu0 %v1750
    %2186 = vmatprep.subr.bf16.mxu0 %v1743
    %2187 = vmatpush1.bf16.msra.mxu0 %v1742
    %2188 = vmatprep.subr.bf16.mxu0 %v1735
    %2189 = vmatpush1.bf16.msra.mxu0 %v1734
    %2190 = vmatprep.subr.bf16.mxu0 %v1727
    %2191 = vmatpush1.bf16.msra.mxu0 %v1726
    %2192 = vmatprep.subr.bf16.mxu0 %v1719
    %2193 = vmatpush1.bf16.msra.mxu0 %v1718
    %2194 = vmatprep.subr.bf16.mxu0 %v1711
    %2195 = vmatpush1.bf16.msra.mxu0 %v1710
    %2196 = vmatprep.subr.bf16.mxu0 0
    %2197 = vmatpush2.bf16.msra.mxu0 0
    %2198 = vmatprep.subr.bf16.mxu0 0
    %2199 = vmatpush2.bf16.msra.mxu0 0
    %2200 = vmatprep.subr.bf16.mxu0 0
    %2201 = vmatpush2.bf16.msra.mxu0 0
    %2202 = vmatprep.subr.bf16.mxu0 0
    %2203 = vmatpush2.bf16.msra.mxu0 0
    %2204 = vmatprep.subr.bf16.mxu0 0
    %2205 = vmatpush2.bf16.msra.mxu0 0
    %2206 = vmatprep.subr.bf16.mxu0 0
    %2207 = vmatpush2.bf16.msra.mxu0 0
    %2208 = vmatprep.subr.bf16.mxu0 0
    %2209 = vmatpush2.bf16.msra.mxu0 0
    %2210 = vmatprep.subr.bf16.mxu0 0
    %2211 = vmatpush2.bf16.msra.mxu0 0
    %2212 = vmatprep.mubr.bf16.mxu0 0
    %2213 = vmatmul.mubr.bf16.gmra.mxu0 %v131
    %v2214 = vpop.f32.mrf.mxu0
    %v2215 = vadd.f32 %v2172, %v2214
    %v2216 = vpop.f32.mrf.mxu0
    %v2217 = vadd.f32 %v2174, %v2216
    %v2218 = vpop.f32.mrf.mxu0
    %v2219 = vadd.f32 %v2176, %v2218
    %v2220 = vpop.f32.mrf.mxu0
    %v2221 = vadd.f32 %v2178, %v2220
    %2222 = vdwg.mxu0
    %2223 = vmatprep.subr.bf16.mxu0 %v1513
    %2224 = vmatpush1.bf16.msra.mxu0 %v1512
    %2225 = vmatprep.subr.bf16.mxu0 %v1505
    %2226 = vmatpush1.bf16.msra.mxu0 %v1504
    %2227 = vmatprep.subr.bf16.mxu0 %v1497
    %2228 = vmatpush1.bf16.msra.mxu0 %v1496
    %2229 = vmatprep.subr.bf16.mxu0 %v1489
    %2230 = vmatpush1.bf16.msra.mxu0 %v1488
    %2231 = vmatprep.subr.bf16.mxu0 %v1481
    %2232 = vmatpush1.bf16.msra.mxu0 %v1480
    %2233 = vmatprep.subr.bf16.mxu0 %v1473
    %2234 = vmatpush1.bf16.msra.mxu0 %v1472
    %2235 = vmatprep.subr.bf16.mxu0 %v1465
    %2236 = vmatpush1.bf16.msra.mxu0 %v1464
    %2237 = vmatprep.subr.bf16.mxu0 %v1457
    %2238 = vmatpush1.bf16.msra.mxu0 %v1456
    %2239 = vmatprep.subr.bf16.mxu0 %v1577
    %2240 = vmatpush2.bf16.msra.mxu0 %v1576
    %2241 = vmatprep.subr.bf16.mxu0 %v1569
    %2242 = vmatpush2.bf16.msra.mxu0 %v1568
    %2243 = vmatprep.subr.bf16.mxu0 %v1561
    %2244 = vmatpush2.bf16.msra.mxu0 %v1560
    %2245 = vmatprep.subr.bf16.mxu0 %v1553
    %2246 = vmatpush2.bf16.msra.mxu0 %v1552
    %2247 = vmatprep.subr.bf16.mxu0 %v1545
    %2248 = vmatpush2.bf16.msra.mxu0 %v1544
    %2249 = vmatprep.subr.bf16.mxu0 %v1537
    %2250 = vmatpush2.bf16.msra.mxu0 %v1536
    %2251 = vmatprep.subr.bf16.mxu0 %v1529
    %2252 = vmatpush2.bf16.msra.mxu0 %v1528
    %2253 = vmatprep.subr.bf16.mxu0 %v1521
    %2254 = vmatpush2.bf16.msra.mxu0 %v1520
    %2255 = vmatprep.mubr.bf16.mxu0 %v128
    %2256 = vmatmul.mubr.bf16.gmra.mxu0 %v127
    %v2257 = vpop.f32.mrf.mxu0
    %v2258 = vadd.f32 %v465, %v2257
    %v2259 = vpop.f32.mrf.mxu0
    %v2260 = vadd.f32 %v469, %v2259
    %v2261 = vpop.f32.mrf.mxu0
    %v2262 = vadd.f32 %v465, %v2261
    %v2263 = vpop.f32.mrf.mxu0
    %v2264 = vadd.f32 %v469, %v2263
    %2265 = vdwg.mxu0
    %2266 = vmatprep.subr.bf16.mxu0 %v1641
    %2267 = vmatpush1.bf16.msra.mxu0 %v1640
    %2268 = vmatprep.subr.bf16.mxu0 %v1633
    %2269 = vmatpush1.bf16.msra.mxu0 %v1632
    %2270 = vmatprep.subr.bf16.mxu0 %v1625
    %2271 = vmatpush1.bf16.msra.mxu0 %v1624
    %2272 = vmatprep.subr.bf16.mxu0 %v1617
    %2273 = vmatpush1.bf16.msra.mxu0 %v1616
    %2274 = vmatprep.subr.bf16.mxu0 %v1609
    %2275 = vmatpush1.bf16.msra.mxu0 %v1608
    %2276 = vmatprep.subr.bf16.mxu0 %v1601
    %2277 = vmatpush1.bf16.msra.mxu0 %v1600
    %2278 = vmatprep.subr.bf16.mxu0 %v1593
    %2279 = vmatpush1.bf16.msra.mxu0 %v1592
    %2280 = vmatprep.subr.bf16.mxu0 %v1585
    %2281 = vmatpush1.bf16.msra.mxu0 %v1584
    %2282 = vmatprep.subr.bf16.mxu0 %v1705
    %2283 = vmatpush2.bf16.msra.mxu0 %v1704
    %2284 = vmatprep.subr.bf16.mxu0 %v1697
    %2285 = vmatpush2.bf16.msra.mxu0 %v1696
    %2286 = vmatprep.subr.bf16.mxu0 %v1689
    %2287 = vmatpush2.bf16.msra.mxu0 %v1688
    %2288 = vmatprep.subr.bf16.mxu0 %v1681
    %2289 = vmatpush2.bf16.msra.mxu0 %v1680
    %2290 = vmatprep.subr.bf16.mxu0 %v1673
    %2291 = vmatpush2.bf16.msra.mxu0 %v1672
    %2292 = vmatprep.subr.bf16.mxu0 %v1665
    %2293 = vmatpush2.bf16.msra.mxu0 %v1664
    %2294 = vmatprep.subr.bf16.mxu0 %v1657
    %2295 = vmatpush2.bf16.msra.mxu0 %v1656
    %2296 = vmatprep.subr.bf16.mxu0 %v1649
    %2297 = vmatpush2.bf16.msra.mxu0 %v1648
    %2298 = vmatprep.mubr.bf16.mxu0 %v130
    %2299 = vmatmul.mubr.bf16.gmra.mxu0 %v129
    %v2300 = vpop.f32.mrf.mxu0
    %v2301 = vadd.f32 %v2258, %v2300
    %v2302 = vpop.f32.mrf.mxu0
    %v2303 = vadd.f32 %v2260, %v2302
    %v2304 = vpop.f32.mrf.mxu0
    %v2305 = vadd.f32 %v2262, %v2304
    %v2306 = vpop.f32.mrf.mxu0
    %v2307 = vadd.f32 %v2264, %v2306
    %2308 = vdwg.mxu0
    %2309 = vmatprep.subr.bf16.mxu0 %v1769
    %2310 = vmatpush1.bf16.msra.mxu0 %v1768
    %2311 = vmatprep.subr.bf16.mxu0 %v1761
    %2312 = vmatpush1.bf16.msra.mxu0 %v1760
    %2313 = vmatprep.subr.bf16.mxu0 %v1753
    %2314 = vmatpush1.bf16.msra.mxu0 %v1752
    %2315 = vmatprep.subr.bf16.mxu0 %v1745
    %2316 = vmatpush1.bf16.msra.mxu0 %v1744
    %2317 = vmatprep.subr.bf16.mxu0 %v1737
    %2318 = vmatpush1.bf16.msra.mxu0 %v1736
    %2319 = vmatprep.subr.bf16.mxu0 %v1729
    %2320 = vmatpush1.bf16.msra.mxu0 %v1728
    %2321 = vmatprep.subr.bf16.mxu0 %v1721
    %2322 = vmatpush1.bf16.msra.mxu0 %v1720
    %2323 = vmatprep.subr.bf16.mxu0 %v1713
    %2324 = vmatpush1.bf16.msra.mxu0 %v1712
    %2325 = vmatprep.subr.bf16.mxu0 0
    %2326 = vmatpush2.bf16.msra.mxu0 0
    %2327 = vmatprep.subr.bf16.mxu0 0
    %2328 = vmatpush2.bf16.msra.mxu0 0
    %2329 = vmatprep.subr.bf16.mxu0 0
    %2330 = vmatpush2.bf16.msra.mxu0 0
    %2331 = vmatprep.subr.bf16.mxu0 0
    %2332 = vmatpush2.bf16.msra.mxu0 0
    %2333 = vmatprep.subr.bf16.mxu0 0
    %2334 = vmatpush2.bf16.msra.mxu0 0
    %2335 = vmatprep.subr.bf16.mxu0 0
    %2336 = vmatpush2.bf16.msra.mxu0 0
    %2337 = vmatprep.subr.bf16.mxu0 0
    %2338 = vmatpush2.bf16.msra.mxu0 0
    %2339 = vmatprep.subr.bf16.mxu0 0
    %2340 = vmatpush2.bf16.msra.mxu0 0
    %2341 = vmatprep.mubr.bf16.mxu0 0
    %2342 = vmatmul.mubr.bf16.gmra.mxu0 %v131
    %v2343 = vpop.f32.mrf.mxu0
    %v2344 = vadd.f32 %v2301, %v2343
    %v2345 = vpop.f32.mrf.mxu0
    %v2346 = vadd.f32 %v2303, %v2345
    %v2347 = vpop.f32.mrf.mxu0
    %v2348 = vadd.f32 %v2305, %v2347
    %v2349 = vpop.f32.mrf.mxu0
    %v2350 = vadd.f32 %v2307, %v2349
    %2351 = vdwg.mxu0
    %2352 = vmatprep.subr.bf16.mxu0 %v1515
    %2353 = vmatpush1.bf16.msra.mxu0 %v1514
    %2354 = vmatprep.subr.bf16.mxu0 %v1507
    %2355 = vmatpush1.bf16.msra.mxu0 %v1506
    %2356 = vmatprep.subr.bf16.mxu0 %v1499
    %2357 = vmatpush1.bf16.msra.mxu0 %v1498
    %2358 = vmatprep.subr.bf16.mxu0 %v1491
    %2359 = vmatpush1.bf16.msra.mxu0 %v1490
    %2360 = vmatprep.subr.bf16.mxu0 %v1483
    %2361 = vmatpush1.bf16.msra.mxu0 %v1482
    %2362 = vmatprep.subr.bf16.mxu0 %v1475
    %2363 = vmatpush1.bf16.msra.mxu0 %v1474
    %2364 = vmatprep.subr.bf16.mxu0 %v1467
    %2365 = vmatpush1.bf16.msra.mxu0 %v1466
    %2366 = vmatprep.subr.bf16.mxu0 %v1459
    %2367 = vmatpush1.bf16.msra.mxu0 %v1458
    %2368 = vmatprep.subr.bf16.mxu0 %v1579
    %2369 = vmatpush2.bf16.msra.mxu0 %v1578
    %2370 = vmatprep.subr.bf16.mxu0 %v1571
    %2371 = vmatpush2.bf16.msra.mxu0 %v1570
    %2372 = vmatprep.subr.bf16.mxu0 %v1563
    %2373 = vmatpush2.bf16.msra.mxu0 %v1562
    %2374 = vmatprep.subr.bf16.mxu0 %v1555
    %2375 = vmatpush2.bf16.msra.mxu0 %v1554
    %2376 = vmatprep.subr.bf16.mxu0 %v1547
    %2377 = vmatpush2.bf16.msra.mxu0 %v1546
    %2378 = vmatprep.subr.bf16.mxu0 %v1539
    %2379 = vmatpush2.bf16.msra.mxu0 %v1538
    %2380 = vmatprep.subr.bf16.mxu0 %v1531
    %2381 = vmatpush2.bf16.msra.mxu0 %v1530
    %2382 = vmatprep.subr.bf16.mxu0 %v1523
    %2383 = vmatpush2.bf16.msra.mxu0 %v1522
    %2384 = vmatprep.mubr.bf16.mxu0 %v128
    %2385 = vmatmul.mubr.bf16.gmra.mxu0 %v127
    %v2386 = vpop.f32.mrf.mxu0
    %v2387 = vadd.f32 %v473, %v2386
    %v2388 = vpop.f32.mrf.mxu0
    %v2389 = vadd.f32 %v477, %v2388
    %v2390 = vpop.f32.mrf.mxu0
    %v2391 = vadd.f32 %v473, %v2390
    %v2392 = vpop.f32.mrf.mxu0
    %v2393 = vadd.f32 %v477, %v2392
    %2394 = vdwg.mxu0
    %2395 = vmatprep.subr.bf16.mxu0 %v1643
    %2396 = vmatpush1.bf16.msra.mxu0 %v1642
    %2397 = vmatprep.subr.bf16.mxu0 %v1635
    %2398 = vmatpush1.bf16.msra.mxu0 %v1634
    %2399 = vmatprep.subr.bf16.mxu0 %v1627
    %2400 = vmatpush1.bf16.msra.mxu0 %v1626
    %2401 = vmatprep.subr.bf16.mxu0 %v1619
    %2402 = vmatpush1.bf16.msra.mxu0 %v1618
    %2403 = vmatprep.subr.bf16.mxu0 %v1611
    %2404 = vmatpush1.bf16.msra.mxu0 %v1610
    %2405 = vmatprep.subr.bf16.mxu0 %v1603
    %2406 = vmatpush1.bf16.msra.mxu0 %v1602
    %2407 = vmatprep.subr.bf16.mxu0 %v1595
    %2408 = vmatpush1.bf16.msra.mxu0 %v1594
    %2409 = vmatprep.subr.bf16.mxu0 %v1587
    %2410 = vmatpush1.bf16.msra.mxu0 %v1586
    %2411 = vmatprep.subr.bf16.mxu0 %v1707
    %2412 = vmatpush2.bf16.msra.mxu0 %v1706
    %2413 = vmatprep.subr.bf16.mxu0 %v1699
    %2414 = vmatpush2.bf16.msra.mxu0 %v1698
    %2415 = vmatprep.subr.bf16.mxu0 %v1691
    %2416 = vmatpush2.bf16.msra.mxu0 %v1690
    %2417 = vmatprep.subr.bf16.mxu0 %v1683
    %2418 = vmatpush2.bf16.msra.mxu0 %v1682
    %2419 = vmatprep.subr.bf16.mxu0 %v1675
    %2420 = vmatpush2.bf16.msra.mxu0 %v1674
    %2421 = vmatprep.subr.bf16.mxu0 %v1667
    %2422 = vmatpush2.bf16.msra.mxu0 %v1666
    %2423 = vmatprep.subr.bf16.mxu0 %v1659
    %2424 = vmatpush2.bf16.msra.mxu0 %v1658
    %2425 = vmatprep.subr.bf16.mxu0 %v1651
    %2426 = vmatpush2.bf16.msra.mxu0 %v1650
    %2427 = vmatprep.mubr.bf16.mxu0 %v130
    %2428 = vmatmul.mubr.bf16.gmra.mxu0 %v129
    %v2429 = vpop.f32.mrf.mxu0
    %v2430 = vadd.f32 %v2387, %v2429
    %v2431 = vpop.f32.mrf.mxu0
    %v2432 = vadd.f32 %v2389, %v2431
    %v2433 = vpop.f32.mrf.mxu0
    %v2434 = vadd.f32 %v2391, %v2433
    %v2435 = vpop.f32.mrf.mxu0
    %v2436 = vadd.f32 %v2393, %v2435
    %2437 = vdwg.mxu0
    %2438 = vmatprep.subr.bf16.mxu0 %v1771
    %2439 = vmatpush1.bf16.msra.mxu0 %v1770
    %2440 = vmatprep.subr.bf16.mxu0 %v1763
    %2441 = vmatpush1.bf16.msra.mxu0 %v1762
    %2442 = vmatprep.subr.bf16.mxu0 %v1755
    %2443 = vmatpush1.bf16.msra.mxu0 %v1754
    %2444 = vmatprep.subr.bf16.mxu0 %v1747
    %2445 = vmatpush1.bf16.msra.mxu0 %v1746
    %2446 = vmatprep.subr.bf16.mxu0 %v1739
    %2447 = vmatpush1.bf16.msra.mxu0 %v1738
    %2448 = vmatprep.subr.bf16.mxu0 %v1731
    %2449 = vmatpush1.bf16.msra.mxu0 %v1730
    %2450 = vmatprep.subr.bf16.mxu0 %v1723
    %2451 = vmatpush1.bf16.msra.mxu0 %v1722
    %2452 = vmatprep.subr.bf16.mxu0 %v1715
    %2453 = vmatpush1.bf16.msra.mxu0 %v1714
    %2454 = vmatprep.subr.bf16.mxu0 0
    %2455 = vmatpush2.bf16.msra.mxu0 0
    %2456 = vmatprep.subr.bf16.mxu0 0
    %2457 = vmatpush2.bf16.msra.mxu0 0
    %2458 = vmatprep.subr.bf16.mxu0 0
    %2459 = vmatpush2.bf16.msra.mxu0 0
    %2460 = vmatprep.subr.bf16.mxu0 0
    %2461 = vmatpush2.bf16.msra.mxu0 0
    %2462 = vmatprep.subr.bf16.mxu0 0
    %2463 = vmatpush2.bf16.msra.mxu0 0
    %2464 = vmatprep.subr.bf16.mxu0 0
    %2465 = vmatpush2.bf16.msra.mxu0 0
    %2466 = vmatprep.subr.bf16.mxu0 0
    %2467 = vmatpush2.bf16.msra.mxu0 0
    %2468 = vmatprep.subr.bf16.mxu0 0
    %2469 = vmatpush2.bf16.msra.mxu0 0
    %2470 = vmatprep.mubr.bf16.mxu0 0
    %2471 = vmatmul.mubr.bf16.gmra.mxu0 %v131
    %v2472 = vpop.f32.mrf.mxu0
    %v2473 = vadd.f32 %v2430, %v2472
    %v2474 = vpop.f32.mrf.mxu0
    %v2475 = vadd.f32 %v2432, %v2474
    %v2476 = vpop.f32.mrf.mxu0
    %v2477 = vadd.f32 %v2434, %v2476
    %v2478 = vpop.f32.mrf.mxu0
    %v2479 = vadd.f32 %v2436, %v2478
    %2480 = vdwg.mxu0
    %2481 = vmatprep.subr.bf16.mxu0 %v1517
    %2482 = vmatpush1.bf16.msra.mxu0 %v1516
    %2483 = vmatprep.subr.bf16.mxu0 %v1509
    %2484 = vmatpush1.bf16.msra.mxu0 %v1508
    %2485 = vmatprep.subr.bf16.mxu0 %v1501
    %2486 = vmatpush1.bf16.msra.mxu0 %v1500
    %2487 = vmatprep.subr.bf16.mxu0 %v1493
    %2488 = vmatpush1.bf16.msra.mxu0 %v1492
    %2489 = vmatprep.subr.bf16.mxu0 %v1485
    %2490 = vmatpush1.bf16.msra.mxu0 %v1484
    %2491 = vmatprep.subr.bf16.mxu0 %v1477
    %2492 = vmatpush1.bf16.msra.mxu0 %v1476
    %2493 = vmatprep.subr.bf16.mxu0 %v1469
    %2494 = vmatpush1.bf16.msra.mxu0 %v1468
    %2495 = vmatprep.subr.bf16.mxu0 %v1461
    %2496 = vmatpush1.bf16.msra.mxu0 %v1460
    %2497 = vmatprep.subr.bf16.mxu0 %v1581
    %2498 = vmatpush2.bf16.msra.mxu0 %v1580
    %2499 = vmatprep.subr.bf16.mxu0 %v1573
    %2500 = vmatpush2.bf16.msra.mxu0 %v1572
    %2501 = vmatprep.subr.bf16.mxu0 %v1565
    %2502 = vmatpush2.bf16.msra.mxu0 %v1564
    %2503 = vmatprep.subr.bf16.mxu0 %v1557
    %2504 = vmatpush2.bf16.msra.mxu0 %v1556
    %2505 = vmatprep.subr.bf16.mxu0 %v1549
    %2506 = vmatpush2.bf16.msra.mxu0 %v1548
    %2507 = vmatprep.subr.bf16.mxu0 %v1541
    %2508 = vmatpush2.bf16.msra.mxu0 %v1540
    %2509 = vmatprep.subr.bf16.mxu0 %v1533
    %2510 = vmatpush2.bf16.msra.mxu0 %v1532
    %2511 = vmatprep.subr.bf16.mxu0 %v1525
    %2512 = vmatpush2.bf16.msra.mxu0 %v1524
    %2513 = vmatprep.mubr.bf16.mxu0 %v128
    %2514 = vmatmul.mubr.bf16.gmra.mxu0 %v127
    %v2515 = vpop.f32.mrf.mxu0
    %v2516 = vadd.f32 %v481, %v2515
    %v2517 = vpop.f32.mrf.mxu0
    %v2518 = vadd.f32 %v485, %v2517
    %v2519 = vpop.f32.mrf.mxu0
    %v2520 = vadd.f32 %v481, %v2519
    %v2521 = vpop.f32.mrf.mxu0
    %v2522 = vadd.f32 %v485, %v2521
    %2523 = vdwg.mxu0
    %2524 = vmatprep.subr.bf16.mxu0 %v1645
    %2525 = vmatpush1.bf16.msra.mxu0 %v1644
    %2526 = vmatprep.subr.bf16.mxu0 %v1637
    %2527 = vmatpush1.bf16.msra.mxu0 %v1636
    %2528 = vmatprep.subr.bf16.mxu0 %v1629
    %2529 = vmatpush1.bf16.msra.mxu0 %v1628
    %2530 = vmatprep.subr.bf16.mxu0 %v1621
    %2531 = vmatpush1.bf16.msra.mxu0 %v1620
    %2532 = vmatprep.subr.bf16.mxu0 %v1613
    %2533 = vmatpush1.bf16.msra.mxu0 %v1612
    %2534 = vmatprep.subr.bf16.mxu0 %v1605
    %2535 = vmatpush1.bf16.msra.mxu0 %v1604
    %2536 = vmatprep.subr.bf16.mxu0 %v1597
    %2537 = vmatpush1.bf16.msra.mxu0 %v1596
    %2538 = vmatprep.subr.bf16.mxu0 %v1589
    %2539 = vmatpush1.bf16.msra.mxu0 %v1588
    %2540 = vmatprep.subr.bf16.mxu0 %v1709
    %2541 = vmatpush2.bf16.msra.mxu0 %v1708
    %2542 = vmatprep.subr.bf16.mxu0 %v1701
    %2543 = vmatpush2.bf16.msra.mxu0 %v1700
    %2544 = vmatprep.subr.bf16.mxu0 %v1693
    %2545 = vmatpush2.bf16.msra.mxu0 %v1692
    %2546 = vmatprep.subr.bf16.mxu0 %v1685
    %2547 = vmatpush2.bf16.msra.mxu0 %v1684
    %2548 = vmatprep.subr.bf16.mxu0 %v1677
    %2549 = vmatpush2.bf16.msra.mxu0 %v1676
    %2550 = vmatprep.subr.bf16.mxu0 %v1669
    %2551 = vmatpush2.bf16.msra.mxu0 %v1668
    %2552 = vmatprep.subr.bf16.mxu0 %v1661
    %2553 = vmatpush2.bf16.msra.mxu0 %v1660
    %2554 = vmatprep.subr.bf16.mxu0 %v1653
    %2555 = vmatpush2.bf16.msra.mxu0 %v1652
    %2556 = vmatprep.mubr.bf16.mxu0 %v130
    %2557 = vmatmul.mubr.bf16.gmra.mxu0 %v129
    %v2558 = vpop.f32.mrf.mxu0
    %v2559 = vadd.f32 %v2516, %v2558
    %v2560 = vpop.f32.mrf.mxu0
    %v2561 = vadd.f32 %v2518, %v2560
    %v2562 = vpop.f32.mrf.mxu0
    %v2563 = vadd.f32 %v2520, %v2562
    %v2564 = vpop.f32.mrf.mxu0
    %v2565 = vadd.f32 %v2522, %v2564
    %2566 = vdwg.mxu0
    %2567 = vmatprep.subr.bf16.mxu0 %v1773
    %2568 = vmatpush1.bf16.msra.mxu0 %v1772
    %2569 = vmatprep.subr.bf16.mxu0 %v1765
    %2570 = vmatpush1.bf16.msra.mxu0 %v1764
    %2571 = vmatprep.subr.bf16.mxu0 %v1757
    %2572 = vmatpush1.bf16.msra.mxu0 %v1756
    %2573 = vmatprep.subr.bf16.mxu0 %v1749
    %2574 = vmatpush1.bf16.msra.mxu0 %v1748
    %2575 = vmatprep.subr.bf16.mxu0 %v1741
    %2576 = vmatpush1.bf16.msra.mxu0 %v1740
    %2577 = vmatprep.subr.bf16.mxu0 %v1733
    %2578 = vmatpush1.bf16.msra.mxu0 %v1732
    %2579 = vmatprep.subr.bf16.mxu0 %v1725
    %2580 = vmatpush1.bf16.msra.mxu0 %v1724
    %2581 = vmatprep.subr.bf16.mxu0 %v1717
    %2582 = vmatpush1.bf16.msra.mxu0 %v1716
    %2583 = vmatprep.subr.bf16.mxu0 0
    %2584 = vmatpush2.bf16.msra.mxu0 0
    %2585 = vmatprep.subr.bf16.mxu0 0
    %2586 = vmatpush2.bf16.msra.mxu0 0
    %2587 = vmatprep.subr.bf16.mxu0 0
    %2588 = vmatpush2.bf16.msra.mxu0 0
    %2589 = vmatprep.subr.bf16.mxu0 0
    %2590 = vmatpush2.bf16.msra.mxu0 0
    %2591 = vmatprep.subr.bf16.mxu0 0
    %2592 = vmatpush2.bf16.msra.mxu0 0
    %2593 = vmatprep.subr.bf16.mxu0 0
    %2594 = vmatpush2.bf16.msra.mxu0 0
    %2595 = vmatprep.subr.bf16.mxu0 0
    %2596 = vmatpush2.bf16.msra.mxu0 0
    %2597 = vmatprep.subr.bf16.mxu0 0
    %2598 = vmatpush2.bf16.msra.mxu0 0
    %2599 = vmatprep.mubr.bf16.mxu0 0
    %2600 = vmatmul.mubr.bf16.gmra.mxu0 %v131
    %v2601 = vpop.f32.mrf.mxu0
    %v2602 = vadd.f32 %v2559, %v2601
    %v2603 = vpop.f32.mrf.mxu0
    %v2604 = vadd.f32 %v2561, %v2603
    %v2605 = vpop.f32.mrf.mxu0
    %v2606 = vadd.f32 %v2563, %v2605
    %v2607 = vpop.f32.mrf.mxu0
    %v2608 = vadd.f32 %v2565, %v2607
    %2609 = vdwg.mxu0
    %v2610 = vmax.f32 %v2215, 0.0
    %v2611 = vmax.f32 %v2217, 0.0
    %v2612 = vmax.f32 %v2344, 0.0
    %v2613 = vmax.f32 %v2346, 0.0
    %v2614 = vmax.f32 %v2473, 0.0
    %v2615 = vmax.f32 %v2475, 0.0
    %v2616 = vmax.f32 %v2602, 0.0
    %v2617 = vmax.f32 %v2604, 0.0
    %v2618 = vmax.f32 %v2219, 0.0
    %v2619 = vmax.f32 %v2221, 0.0
    %v2620 = vmax.f32 %v2348, 0.0
    %v2621 = vmax.f32 %v2350, 0.0
    %v2622 = vmax.f32 %v2477, 0.0
    %v2623 = vmax.f32 %v2479, 0.0
    %v2624 = vmax.f32 %v2606, 0.0
    %v2625 = vmax.f32 %v2608, 0.0
    %v2626 = vpack.c.bf16 %v2618, %v2610
    %v2627 = vpack.c.bf16 %v2619, %v2611
    %v2628 = vpack.c.bf16 %v2620, %v2612
    %v2629 = vpack.c.bf16 %v2621, %v2613
    %v2630 = vpack.c.bf16 %v2622, %v2614
    %v2631 = vpack.c.bf16 %v2623, %v2615
    %v2632 = vpack.c.bf16 %v2624, %v2616
    %v2633 = vpack.c.bf16 %v2625, %v2617
    %v2634 = vld [vmem:[#allocation8] sm:$0xf]
    %v2635 = vld [vmem:[#allocation8 + $0x4] sm:$0xf]
    %v2636 = vld [vmem:[#allocation8 + $0x8] sm:$0xf]
    %v2637 = vld [vmem:[#allocation8 + $0xc] sm:$0xf]
    %v2638 = vld [vmem:[#allocation8 + $0x10] sm:$0xf]
    %v2639 = vld [vmem:[#allocation8 + $0x14] sm:$0xf]
    %v2640 = vld [vmem:[#allocation8 + $0x18] sm:$0xf]
    %v2641 = vld [vmem:[#allocation8 + $0x1c] sm:$0xf]
    %v2642 = vld [vmem:[#allocation8 + $0x20] sm:$0xf]
    %v2643 = vld [vmem:[#allocation8 + $0x24] sm:$0xf]
    %v2644 = vld [vmem:[#allocation8 + $0x28] sm:$0xf]
    %v2645 = vld [vmem:[#allocation8 + $0x2c] sm:$0xf]
    %v2646 = vld [vmem:[#allocation8 + $0x30] sm:$0xf]
    %v2647 = vld [vmem:[#allocation8 + $0x34] sm:$0xf]
    %v2648 = vld [vmem:[#allocation8 + $0x38] sm:$0xf]
    %v2649 = vld [vmem:[#allocation8 + $0x3c] sm:$0xf]
    %v2650 = vld [vmem:[#allocation8 + $0x40] sm:$0xf]
    %v2651 = vld [vmem:[#allocation8 + $0x44] sm:$0xf]
    %v2652 = vld [vmem:[#allocation8 + $0x48] sm:$0xf]
    %v2653 = vld [vmem:[#allocation8 + $0x4c] sm:$0xf]
    %v2654 = vld [vmem:[#allocation8 + $0x50] sm:$0xf]
    %v2655 = vld [vmem:[#allocation8 + $0x54] sm:$0xf]
    %v2656 = vld [vmem:[#allocation8 + $0x58] sm:$0xf]
    %v2657 = vld [vmem:[#allocation8 + $0x5c] sm:$0xf]
    %v2658 = vld [vmem:[#allocation8 + $0x60] sm:$0xf]
    %v2659 = vld [vmem:[#allocation8 + $0x64] sm:$0xf]
    %v2660 = vld [vmem:[#allocation8 + $0x68] sm:$0xf]
    %v2661 = vld [vmem:[#allocation8 + $0x6c] sm:$0xf]
    %v2662 = vld [vmem:[#allocation8 + $0x70] sm:$0xf]
    %v2663 = vld [vmem:[#allocation8 + $0x74] sm:$0xf]
    %v2664 = vld [vmem:[#allocation8 + $0x78] sm:$0xf]
    %v2665 = vld [vmem:[#allocation8 + $0x7c] sm:$0xf]
    %v2666 = vld [vmem:[#allocation8 + $0x80] sm:$0xf]
    %v2667 = vld [vmem:[#allocation8 + $0x84] sm:$0xf]
    %v2668 = vld [vmem:[#allocation8 + $0x88] sm:$0xf]
    %v2669 = vld [vmem:[#allocation8 + $0x8c] sm:$0xf]
    %v2670 = vld [vmem:[#allocation8 + $0x90] sm:$0xf]
    %v2671 = vld [vmem:[#allocation8 + $0x94] sm:$0xf]
    %v2672 = vld [vmem:[#allocation8 + $0x98] sm:$0xf]
    %v2673 = vld [vmem:[#allocation8 + $0x9c] sm:$0xf]
    %v2674 = vld [vmem:[#allocation8 + $0xa0] sm:$0xf]
    %v2675 = vld [vmem:[#allocation8 + $0xa4] sm:$0xf]
    %v2676 = vld [vmem:[#allocation8 + $0xa8] sm:$0xf]
    %v2677 = vld [vmem:[#allocation8 + $0xac] sm:$0xf]
    %v2678 = vld [vmem:[#allocation8 + $0xb0] sm:$0xf]
    %v2679 = vld [vmem:[#allocation8 + $0xb4] sm:$0xf]
    %v2680 = vld [vmem:[#allocation8 + $0xb8] sm:$0xf]
    %v2681 = vld [vmem:[#allocation8 + $0xbc] sm:$0xf]
    %v2682 = vld [vmem:[#allocation8 + $0xc0] sm:$0xf]
    %v2683 = vld [vmem:[#allocation8 + $0xc4] sm:$0xf]
    %v2684 = vld [vmem:[#allocation8 + $0xc8] sm:$0xf]
    %v2685 = vld [vmem:[#allocation8 + $0xcc] sm:$0xf]
    %v2686 = vld [vmem:[#allocation8 + $0xd0] sm:$0xf]
    %v2687 = vld [vmem:[#allocation8 + $0xd4] sm:$0xf]
    %v2688 = vld [vmem:[#allocation8 + $0xd8] sm:$0xf]
    %v2689 = vld [vmem:[#allocation8 + $0xdc] sm:$0xf]
    %v2690 = vld [vmem:[#allocation8 + $0xe0] sm:$0xf]
    %v2691 = vld [vmem:[#allocation8 + $0xe4] sm:$0xf]
    %v2692 = vld [vmem:[#allocation8 + $0xe8] sm:$0xf]
    %v2693 = vld [vmem:[#allocation8 + $0xec] sm:$0xf]
    %v2694 = vld [vmem:[#allocation8 + $0xf0] sm:$0xf]
    %v2695 = vld [vmem:[#allocation8 + $0xf4] sm:$0xf]
    %v2696 = vld [vmem:[#allocation8 + $0xf8] sm:$0xf]
    %v2697 = vld [vmem:[#allocation8 + $0xfc] sm:$0xf]
    %v2698 = vld [vmem:[#allocation8 + $0x100] sm:$0xf]
    %v2699 = vld [vmem:[#allocation8 + $0x104] sm:$0xf]
    %v2700 = vld [vmem:[#allocation8 + $0x108] sm:$0xf]
    %v2701 = vld [vmem:[#allocation8 + $0x10c] sm:$0xf]
    %v2702 = vld [vmem:[#allocation8 + $0x110] sm:$0xf]
    %v2703 = vld [vmem:[#allocation8 + $0x114] sm:$0xf]
    %v2704 = vld [vmem:[#allocation8 + $0x118] sm:$0xf]
    %v2705 = vld [vmem:[#allocation8 + $0x11c] sm:$0xf]
    %v2706 = vld [vmem:[#allocation8 + $0x120] sm:$0xf]
    %v2707 = vld [vmem:[#allocation8 + $0x124] sm:$0xf]
    %v2708 = vld [vmem:[#allocation8 + $0x128] sm:$0xf]
    %v2709 = vld [vmem:[#allocation8 + $0x12c] sm:$0xf]
    %v2710 = vld [vmem:[#allocation8 + $0x130] sm:$0xf]
    %v2711 = vld [vmem:[#allocation8 + $0x134] sm:$0xf]
    %v2712 = vld [vmem:[#allocation8 + $0x138] sm:$0xf]
    %v2713 = vld [vmem:[#allocation8 + $0x13c] sm:$0xf]
    %v2714 = vld [vmem:[#allocation8 + $0x140] sm:$0xf]
    %v2715 = vld [vmem:[#allocation8 + $0x144] sm:$0xf]
    %v2716 = vld [vmem:[#allocation8 + $0x148] sm:$0xf]
    %v2717 = vld [vmem:[#allocation8 + $0x14c] sm:$0xf]
    %v2718 = vld [vmem:[#allocation8 + $0x150] sm:$0xf]
    %v2719 = vld [vmem:[#allocation8 + $0x154] sm:$0xf]
    %v2720 = vld [vmem:[#allocation8 + $0x158] sm:$0xf]
    %v2721 = vld [vmem:[#allocation8 + $0x15c] sm:$0xf]
    %v2722 = vld [vmem:[#allocation8 + $0x160] sm:$0xf]
    %v2723 = vld [vmem:[#allocation8 + $0x164] sm:$0xf]
    %v2724 = vld [vmem:[#allocation8 + $0x168] sm:$0xf]
    %v2725 = vld [vmem:[#allocation8 + $0x16c] sm:$0xf]
    %v2726 = vld [vmem:[#allocation8 + $0x170] sm:$0xf]
    %v2727 = vld [vmem:[#allocation8 + $0x174] sm:$0xf]
    %v2728 = vld [vmem:[#allocation8 + $0x178] sm:$0xf]
    %v2729 = vld [vmem:[#allocation8 + $0x17c] sm:$0xf]
    %v2730 = vld [vmem:[#allocation8 + $0x180] sm:$0xf]
    %v2731 = vld [vmem:[#allocation8 + $0x184] sm:$0xf]
    %v2732 = vld [vmem:[#allocation8 + $0x188] sm:$0xf]
    %v2733 = vld [vmem:[#allocation8 + $0x18c] sm:$0xf]
    %v2734 = vld [vmem:[#allocation8 + $0x190] sm:$0xf]
    %v2735 = vld [vmem:[#allocation8 + $0x194] sm:$0xf]
    %v2736 = vld [vmem:[#allocation8 + $0x198] sm:$0xf]
    %v2737 = vld [vmem:[#allocation8 + $0x19c] sm:$0xf]
    %v2738 = vld [vmem:[#allocation8 + $0x1a0] sm:$0xf]
    %v2739 = vld [vmem:[#allocation8 + $0x1a4] sm:$0xf]
    %v2740 = vld [vmem:[#allocation8 + $0x1a8] sm:$0xf]
    %v2741 = vld [vmem:[#allocation8 + $0x1ac] sm:$0xf]
    %v2742 = vld [vmem:[#allocation8 + $0x1b0] sm:$0xf]
    %v2743 = vld [vmem:[#allocation8 + $0x1b4] sm:$0xf]
    %v2744 = vld [vmem:[#allocation8 + $0x1b8] sm:$0xf]
    %v2745 = vld [vmem:[#allocation8 + $0x1bc] sm:$0xf]
    %v2746 = vld [vmem:[#allocation8 + $0x1c0] sm:$0xf]
    %v2747 = vld [vmem:[#allocation8 + $0x1c4] sm:$0xf]
    %v2748 = vld [vmem:[#allocation8 + $0x1c8] sm:$0xf]
    %v2749 = vld [vmem:[#allocation8 + $0x1cc] sm:$0xf]
    %v2750 = vld [vmem:[#allocation8 + $0x1d0] sm:$0xf]
    %v2751 = vld [vmem:[#allocation8 + $0x1d4] sm:$0xf]
    %v2752 = vld [vmem:[#allocation8 + $0x1d8] sm:$0xf]
    %v2753 = vld [vmem:[#allocation8 + $0x1dc] sm:$0xf]
    %v2754 = vld [vmem:[#allocation8 + $0x1e0] sm:$0xf]
    %v2755 = vld [vmem:[#allocation8 + $0x1e4] sm:$0xf]
    %v2756 = vld [vmem:[#allocation8 + $0x1e8] sm:$0xf]
    %v2757 = vld [vmem:[#allocation8 + $0x1ec] sm:$0xf]
    %v2758 = vld [vmem:[#allocation8 + $0x1f0] sm:$0xf]
    %v2759 = vld [vmem:[#allocation8 + $0x1f4] sm:$0xf]
    %v2760 = vld [vmem:[#allocation8 + $0x1f8] sm:$0xf]
    %v2761 = vld [vmem:[#allocation8 + $0x1fc] sm:$0xf]
    %v2762 = vld [vmem:[#allocation10] sm:$0x1]
    %v2764 = vlaneseq
    %v2765 = vshrl.u32 %v2764, 7
    %v2766 = vsub.s32 0, %v2765
    %v2767 = vrot.slane %v2762, %v2766
    %v2897 = vunpack.c.l.b16 %v2634
    %v2898 = vunpack.c.l.b16 %v2635
    %v2899 = vunpack.c.l.b16 %v2636
    %v2900 = vunpack.c.l.b16 %v2637
    %v2901 = vunpack.c.l.b16 %v2638
    %v2902 = vunpack.c.l.b16 %v2639
    %v2903 = vunpack.c.l.b16 %v2640
    %v2904 = vunpack.c.l.b16 %v2641
    %v2905 = vunpack.c.l.b16 %v2642
    %v2906 = vunpack.c.l.b16 %v2643
    %v2907 = vunpack.c.l.b16 %v2644
    %v2908 = vunpack.c.l.b16 %v2645
    %v2909 = vunpack.c.l.b16 %v2646
    %v2910 = vunpack.c.l.b16 %v2647
    %v2911 = vunpack.c.l.b16 %v2648
    %v2912 = vunpack.c.l.b16 %v2649
    %v2913 = vunpack.c.l.b16 %v2650
    %v2914 = vunpack.c.l.b16 %v2651
    %v2915 = vunpack.c.l.b16 %v2652
    %v2916 = vunpack.c.l.b16 %v2653
    %v2917 = vunpack.c.l.b16 %v2654
    %v2918 = vunpack.c.l.b16 %v2655
    %v2919 = vunpack.c.l.b16 %v2656
    %v2920 = vunpack.c.l.b16 %v2657
    %v2921 = vunpack.c.l.b16 %v2658
    %v2922 = vunpack.c.l.b16 %v2659
    %v2923 = vunpack.c.l.b16 %v2660
    %v2924 = vunpack.c.l.b16 %v2661
    %v2925 = vunpack.c.l.b16 %v2662
    %v2926 = vunpack.c.l.b16 %v2663
    %v2927 = vunpack.c.l.b16 %v2664
    %v2928 = vunpack.c.l.b16 %v2665
    %v2929 = vunpack.c.l.b16 %v2666
    %v2930 = vunpack.c.l.b16 %v2667
    %v2931 = vunpack.c.l.b16 %v2668
    %v2932 = vunpack.c.l.b16 %v2669
    %v2933 = vunpack.c.l.b16 %v2670
    %v2934 = vunpack.c.l.b16 %v2671
    %v2935 = vunpack.c.l.b16 %v2672
    %v2936 = vunpack.c.l.b16 %v2673
    %v2937 = vunpack.c.l.b16 %v2674
    %v2938 = vunpack.c.l.b16 %v2675
    %v2939 = vunpack.c.l.b16 %v2676
    %v2940 = vunpack.c.l.b16 %v2677
    %v2941 = vunpack.c.l.b16 %v2678
    %v2942 = vunpack.c.l.b16 %v2679
    %v2943 = vunpack.c.l.b16 %v2680
    %v2944 = vunpack.c.l.b16 %v2681
    %v2945 = vunpack.c.l.b16 %v2682
    %v2946 = vunpack.c.l.b16 %v2683
    %v2947 = vunpack.c.l.b16 %v2684
    %v2948 = vunpack.c.l.b16 %v2685
    %v2949 = vunpack.c.l.b16 %v2686
    %v2950 = vunpack.c.l.b16 %v2687
    %v2951 = vunpack.c.l.b16 %v2688
    %v2952 = vunpack.c.l.b16 %v2689
    %v2953 = vunpack.c.l.b16 %v2690
    %v2954 = vunpack.c.l.b16 %v2691
    %v2955 = vunpack.c.l.b16 %v2692
    %v2956 = vunpack.c.l.b16 %v2693
    %v2957 = vunpack.c.l.b16 %v2694
    %v2958 = vunpack.c.l.b16 %v2695
    %v2959 = vunpack.c.l.b16 %v2696
    %v2960 = vunpack.c.l.b16 %v2697
    %v2961 = vunpack.c.l.b16 %v2698
    %v2962 = vunpack.c.l.b16 %v2699
    %v2963 = vunpack.c.l.b16 %v2700
    %v2964 = vunpack.c.l.b16 %v2701
    %v2965 = vunpack.c.l.b16 %v2702
    %v2966 = vunpack.c.l.b16 %v2703
    %v2967 = vunpack.c.l.b16 %v2704
    %v2968 = vunpack.c.l.b16 %v2705
    %v2969 = vunpack.c.l.b16 %v2706
    %v2970 = vunpack.c.l.b16 %v2707
    %v2971 = vunpack.c.l.b16 %v2708
    %v2972 = vunpack.c.l.b16 %v2709
    %v2973 = vunpack.c.l.b16 %v2710
    %v2974 = vunpack.c.l.b16 %v2711
    %v2975 = vunpack.c.l.b16 %v2712
    %v2976 = vunpack.c.l.b16 %v2713
    %v2977 = vunpack.c.l.b16 %v2714
    %v2978 = vunpack.c.l.b16 %v2715
    %v2979 = vunpack.c.l.b16 %v2716
    %v2980 = vunpack.c.l.b16 %v2717
    %v2981 = vunpack.c.l.b16 %v2718
    %v2982 = vunpack.c.l.b16 %v2719
    %v2983 = vunpack.c.l.b16 %v2720
    %v2984 = vunpack.c.l.b16 %v2721
    %v2985 = vunpack.c.l.b16 %v2722
    %v2986 = vunpack.c.l.b16 %v2723
    %v2987 = vunpack.c.l.b16 %v2724
    %v2988 = vunpack.c.l.b16 %v2725
    %v2989 = vunpack.c.l.b16 %v2726
    %v2990 = vunpack.c.l.b16 %v2727
    %v2991 = vunpack.c.l.b16 %v2728
    %v2992 = vunpack.c.l.b16 %v2729
    %v2993 = vunpack.c.l.b16 %v2730
    %v2994 = vunpack.c.l.b16 %v2731
    %v2995 = vunpack.c.l.b16 %v2732
    %v2996 = vunpack.c.l.b16 %v2733
    %v2997 = vunpack.c.l.b16 %v2734
    %v2998 = vunpack.c.l.b16 %v2735
    %v2999 = vunpack.c.l.b16 %v2736
    %v3000 = vunpack.c.l.b16 %v2737
    %v3001 = vunpack.c.l.b16 %v2738
    %v3002 = vunpack.c.l.b16 %v2739
    %v3003 = vunpack.c.l.b16 %v2740
    %v3004 = vunpack.c.l.b16 %v2741
    %v3005 = vunpack.c.l.b16 %v2742
    %v3006 = vunpack.c.l.b16 %v2743
    %v3007 = vunpack.c.l.b16 %v2744
    %v3008 = vunpack.c.l.b16 %v2745
    %v3009 = vunpack.c.l.b16 %v2746
    %v3010 = vunpack.c.l.b16 %v2747
    %v3011 = vunpack.c.l.b16 %v2748
    %v3012 = vunpack.c.l.b16 %v2749
    %v3013 = vunpack.c.l.b16 %v2750
    %v3014 = vunpack.c.l.b16 %v2751
    %v3015 = vunpack.c.l.b16 %v2752
    %v3016 = vunpack.c.l.b16 %v2753
    %v3017 = vunpack.c.l.b16 %v2754
    %v3018 = vunpack.c.l.b16 %v2755
    %v3019 = vunpack.c.l.b16 %v2756
    %v3020 = vunpack.c.l.b16 %v2757
    %v3021 = vunpack.c.l.b16 %v2758
    %v3022 = vunpack.c.l.b16 %v2759
    %v3023 = vunpack.c.l.b16 %v2760
    %v3024 = vunpack.c.l.b16 %v2761
    %v3025 = vpack.c.b16 %v2898, %v2897
    %v3026 = vpack.c.b16 %v2900, %v2899
    %v3027 = vpack.c.b16 %v2902, %v2901
    %v3028 = vpack.c.b16 %v2904, %v2903
    %v3029 = vpack.c.b16 %v2906, %v2905
    %v3030 = vpack.c.b16 %v2908, %v2907
    %v3031 = vpack.c.b16 %v2910, %v2909
    %v3032 = vpack.c.b16 %v2912, %v2911
    %v3033 = vpack.c.b16 %v2914, %v2913
    %v3034 = vpack.c.b16 %v2916, %v2915
    %v3035 = vpack.c.b16 %v2918, %v2917
    %v3036 = vpack.c.b16 %v2920, %v2919
    %v3037 = vpack.c.b16 %v2922, %v2921
    %v3038 = vpack.c.b16 %v2924, %v2923
    %v3039 = vpack.c.b16 %v2926, %v2925
    %v3040 = vpack.c.b16 %v2928, %v2927
    %v3041 = vpack.c.b16 %v2930, %v2929
    %v3042 = vpack.c.b16 %v2932, %v2931
    %v3043 = vpack.c.b16 %v2934, %v2933
    %v3044 = vpack.c.b16 %v2936, %v2935
    %v3045 = vpack.c.b16 %v2938, %v2937
    %v3046 = vpack.c.b16 %v2940, %v2939
    %v3047 = vpack.c.b16 %v2942, %v2941
    %v3048 = vpack.c.b16 %v2944, %v2943
    %v3049 = vpack.c.b16 %v2946, %v2945
    %v3050 = vpack.c.b16 %v2948, %v2947
    %v3051 = vpack.c.b16 %v2950, %v2949
    %v3052 = vpack.c.b16 %v2952, %v2951
    %v3053 = vpack.c.b16 %v2954, %v2953
    %v3054 = vpack.c.b16 %v2956, %v2955
    %v3055 = vpack.c.b16 %v2958, %v2957
    %v3056 = vpack.c.b16 %v2960, %v2959
    %v3057 = vpack.c.b16 %v2962, %v2961
    %v3058 = vpack.c.b16 %v2964, %v2963
    %v3059 = vpack.c.b16 %v2966, %v2965
    %v3060 = vpack.c.b16 %v2968, %v2967
    %v3061 = vpack.c.b16 %v2970, %v2969
    %v3062 = vpack.c.b16 %v2972, %v2971
    %v3063 = vpack.c.b16 %v2974, %v2973
    %v3064 = vpack.c.b16 %v2976, %v2975
    %v3065 = vpack.c.b16 %v2978, %v2977
    %v3066 = vpack.c.b16 %v2980, %v2979
    %v3067 = vpack.c.b16 %v2982, %v2981
    %v3068 = vpack.c.b16 %v2984, %v2983
    %v3069 = vpack.c.b16 %v2986, %v2985
    %v3070 = vpack.c.b16 %v2988, %v2987
    %v3071 = vpack.c.b16 %v2990, %v2989
    %v3072 = vpack.c.b16 %v2992, %v2991
    %v3073 = vpack.c.b16 %v2994, %v2993
    %v3074 = vpack.c.b16 %v2996, %v2995
    %v3075 = vpack.c.b16 %v2998, %v2997
    %v3076 = vpack.c.b16 %v3000, %v2999
    %v3077 = vpack.c.b16 %v3002, %v3001
    %v3078 = vpack.c.b16 %v3004, %v3003
    %v3079 = vpack.c.b16 %v3006, %v3005
    %v3080 = vpack.c.b16 %v3008, %v3007
    %v3081 = vpack.c.b16 %v3010, %v3009
    %v3082 = vpack.c.b16 %v3012, %v3011
    %v3083 = vpack.c.b16 %v3014, %v3013
    %v3084 = vpack.c.b16 %v3016, %v3015
    %v3085 = vpack.c.b16 %v3018, %v3017
    %v3086 = vpack.c.b16 %v3020, %v3019
    %v3087 = vpack.c.b16 %v3022, %v3021
    %v3088 = vpack.c.b16 %v3024, %v3023
    %3153 = vmatprep.subr.bf16.mxu0 0
    %3154 = vmatpush1.bf16.msra.mxu0 %v3032
    %3155 = vmatprep.subr.bf16.mxu0 0
    %3156 = vmatpush1.bf16.msra.mxu0 %v3031
    %3157 = vmatprep.subr.bf16.mxu0 0
    %3158 = vmatpush1.bf16.msra.mxu0 %v3030
    %3159 = vmatprep.subr.bf16.mxu0 0
    %3160 = vmatpush1.bf16.msra.mxu0 %v3029
    %3161 = vmatprep.subr.bf16.mxu0 0
    %3162 = vmatpush1.bf16.msra.mxu0 %v3028
    %3163 = vmatprep.subr.bf16.mxu0 0
    %3164 = vmatpush1.bf16.msra.mxu0 %v3027
    %3165 = vmatprep.subr.bf16.mxu0 0
    %3166 = vmatpush1.bf16.msra.mxu0 %v3026
    %3167 = vmatprep.subr.bf16.mxu0 0
    %3168 = vmatpush1.bf16.msra.mxu0 %v3025
    %3169 = vmatprep.subr.bf16.mxu0 0
    %3170 = vmatpush2.bf16.msra.mxu0 %v3040
    %3171 = vmatprep.subr.bf16.mxu0 0
    %3172 = vmatpush2.bf16.msra.mxu0 %v3039
    %3173 = vmatprep.subr.bf16.mxu0 0
    %3174 = vmatpush2.bf16.msra.mxu0 %v3038
    %3175 = vmatprep.subr.bf16.mxu0 0
    %3176 = vmatpush2.bf16.msra.mxu0 %v3037
    %3177 = vmatprep.subr.bf16.mxu0 0
    %3178 = vmatpush2.bf16.msra.mxu0 %v3036
    %3179 = vmatprep.subr.bf16.mxu0 0
    %3180 = vmatpush2.bf16.msra.mxu0 %v3035
    %3181 = vmatprep.subr.bf16.mxu0 0
    %3182 = vmatpush2.bf16.msra.mxu0 %v3034
    %3183 = vmatprep.subr.bf16.mxu0 0
    %3184 = vmatpush2.bf16.msra.mxu0 %v3033
    %3185 = vmatprep.mubr.bf16.mxu0 %v2627
    %3186 = vmatmul.mubr.bf16.gmra.mxu0 %v2626
    %v3187 = vpop.f32.mrf.mxu0
    %v3188 = vadd.f32 %v2767, %v3187
    %v3189 = vpop.f32.mrf.mxu0
    %v3190 = vpop.f32.mrf.mxu0
    %v3191 = vadd.f32 %v2767, %v3190
    %v3192 = vpop.f32.mrf.mxu0
    %3193 = vdwg.mxu0
    %3194 = vmatprep.subr.bf16.mxu0 0
    %3195 = vmatpush1.bf16.msra.mxu0 %v3048
    %3196 = vmatprep.subr.bf16.mxu0 0
    %3197 = vmatpush1.bf16.msra.mxu0 %v3047
    %3198 = vmatprep.subr.bf16.mxu0 0
    %3199 = vmatpush1.bf16.msra.mxu0 %v3046
    %3200 = vmatprep.subr.bf16.mxu0 0
    %3201 = vmatpush1.bf16.msra.mxu0 %v3045
    %3202 = vmatprep.subr.bf16.mxu0 0
    %3203 = vmatpush1.bf16.msra.mxu0 %v3044
    %3204 = vmatprep.subr.bf16.mxu0 0
    %3205 = vmatpush1.bf16.msra.mxu0 %v3043
    %3206 = vmatprep.subr.bf16.mxu0 0
    %3207 = vmatpush1.bf16.msra.mxu0 %v3042
    %3208 = vmatprep.subr.bf16.mxu0 0
    %3209 = vmatpush1.bf16.msra.mxu0 %v3041
    %3210 = vmatprep.subr.bf16.mxu0 0
    %3211 = vmatpush2.bf16.msra.mxu0 %v3056
    %3212 = vmatprep.subr.bf16.mxu0 0
    %3213 = vmatpush2.bf16.msra.mxu0 %v3055
    %3214 = vmatprep.subr.bf16.mxu0 0
    %3215 = vmatpush2.bf16.msra.mxu0 %v3054
    %3216 = vmatprep.subr.bf16.mxu0 0
    %3217 = vmatpush2.bf16.msra.mxu0 %v3053
    %3218 = vmatprep.subr.bf16.mxu0 0
    %3219 = vmatpush2.bf16.msra.mxu0 %v3052
    %3220 = vmatprep.subr.bf16.mxu0 0
    %3221 = vmatpush2.bf16.msra.mxu0 %v3051
    %3222 = vmatprep.subr.bf16.mxu0 0
    %3223 = vmatpush2.bf16.msra.mxu0 %v3050
    %3224 = vmatprep.subr.bf16.mxu0 0
    %3225 = vmatpush2.bf16.msra.mxu0 %v3049
    %3226 = vmatprep.mubr.bf16.mxu0 %v2629
    %3227 = vmatmul.mubr.bf16.gmra.mxu0 %v2628
    %v3228 = vpop.f32.mrf.mxu0
    %v3229 = vadd.f32 %v3188, %v3228
    %v3230 = vpop.f32.mrf.mxu0
    %v3231 = vpop.f32.mrf.mxu0
    %v3232 = vadd.f32 %v3191, %v3231
    %v3233 = vpop.f32.mrf.mxu0
    %3234 = vdwg.mxu0
    %3235 = vmatprep.subr.bf16.mxu0 0
    %3236 = vmatpush1.bf16.msra.mxu0 %v3064
    %3237 = vmatprep.subr.bf16.mxu0 0
    %3238 = vmatpush1.bf16.msra.mxu0 %v3063
    %3239 = vmatprep.subr.bf16.mxu0 0
    %3240 = vmatpush1.bf16.msra.mxu0 %v3062
    %3241 = vmatprep.subr.bf16.mxu0 0
    %3242 = vmatpush1.bf16.msra.mxu0 %v3061
    %3243 = vmatprep.subr.bf16.mxu0 0
    %3244 = vmatpush1.bf16.msra.mxu0 %v3060
    %3245 = vmatprep.subr.bf16.mxu0 0
    %3246 = vmatpush1.bf16.msra.mxu0 %v3059
    %3247 = vmatprep.subr.bf16.mxu0 0
    %3248 = vmatpush1.bf16.msra.mxu0 %v3058
    %3249 = vmatprep.subr.bf16.mxu0 0
    %3250 = vmatpush1.bf16.msra.mxu0 %v3057
    %3251 = vmatprep.subr.bf16.mxu0 0
    %3252 = vmatpush2.bf16.msra.mxu0 %v3072
    %3253 = vmatprep.subr.bf16.mxu0 0
    %3254 = vmatpush2.bf16.msra.mxu0 %v3071
    %3255 = vmatprep.subr.bf16.mxu0 0
    %3256 = vmatpush2.bf16.msra.mxu0 %v3070
    %3257 = vmatprep.subr.bf16.mxu0 0
    %3258 = vmatpush2.bf16.msra.mxu0 %v3069
    %3259 = vmatprep.subr.bf16.mxu0 0
    %3260 = vmatpush2.bf16.msra.mxu0 %v3068
    %3261 = vmatprep.subr.bf16.mxu0 0
    %3262 = vmatpush2.bf16.msra.mxu0 %v3067
    %3263 = vmatprep.subr.bf16.mxu0 0
    %3264 = vmatpush2.bf16.msra.mxu0 %v3066
    %3265 = vmatprep.subr.bf16.mxu0 0
    %3266 = vmatpush2.bf16.msra.mxu0 %v3065
    %3267 = vmatprep.mubr.bf16.mxu0 %v2631
    %3268 = vmatmul.mubr.bf16.gmra.mxu0 %v2630
    %v3269 = vpop.f32.mrf.mxu0
    %v3270 = vadd.f32 %v3229, %v3269
    %v3271 = vpop.f32.mrf.mxu0
    %v3272 = vpop.f32.mrf.mxu0
    %v3273 = vadd.f32 %v3232, %v3272
    %v3274 = vpop.f32.mrf.mxu0
    %3275 = vdwg.mxu0
    %3276 = vmatprep.subr.bf16.mxu0 0
    %3277 = vmatpush1.bf16.msra.mxu0 %v3080
    %3278 = vmatprep.subr.bf16.mxu0 0
    %3279 = vmatpush1.bf16.msra.mxu0 %v3079
    %3280 = vmatprep.subr.bf16.mxu0 0
    %3281 = vmatpush1.bf16.msra.mxu0 %v3078
    %3282 = vmatprep.subr.bf16.mxu0 0
    %3283 = vmatpush1.bf16.msra.mxu0 %v3077
    %3284 = vmatprep.subr.bf16.mxu0 0
    %3285 = vmatpush1.bf16.msra.mxu0 %v3076
    %3286 = vmatprep.subr.bf16.mxu0 0
    %3287 = vmatpush1.bf16.msra.mxu0 %v3075
    %3288 = vmatprep.subr.bf16.mxu0 0
    %3289 = vmatpush1.bf16.msra.mxu0 %v3074
    %3290 = vmatprep.subr.bf16.mxu0 0
    %3291 = vmatpush1.bf16.msra.mxu0 %v3073
    %3292 = vmatprep.subr.bf16.mxu0 0
    %3293 = vmatpush2.bf16.msra.mxu0 %v3088
    %3294 = vmatprep.subr.bf16.mxu0 0
    %3295 = vmatpush2.bf16.msra.mxu0 %v3087
    %3296 = vmatprep.subr.bf16.mxu0 0
    %3297 = vmatpush2.bf16.msra.mxu0 %v3086
    %3298 = vmatprep.subr.bf16.mxu0 0
    %3299 = vmatpush2.bf16.msra.mxu0 %v3085
    %3300 = vmatprep.subr.bf16.mxu0 0
    %3301 = vmatpush2.bf16.msra.mxu0 %v3084
    %3302 = vmatprep.subr.bf16.mxu0 0
    %3303 = vmatpush2.bf16.msra.mxu0 %v3083
    %3304 = vmatprep.subr.bf16.mxu0 0
    %3305 = vmatpush2.bf16.msra.mxu0 %v3082
    %3306 = vmatprep.subr.bf16.mxu0 0
    %3307 = vmatpush2.bf16.msra.mxu0 %v3081
    %3308 = vmatprep.mubr.bf16.mxu0 %v2633
    %3309 = vmatmul.mubr.bf16.gmra.mxu0 %v2632
    %v3310 = vpop.f32.mrf.mxu0
    %v3311 = vadd.f32 %v3270, %v3310
    %v3312 = vpop.f32.mrf.mxu0
    %v3313 = vpop.f32.mrf.mxu0
    %v3314 = vadd.f32 %v3273, %v3313
    %v3315 = vpop.f32.mrf.mxu0
    %3316 = vdwg.mxu0
    %v3317 = vmax.f32 %v3311, 0.0
    %v3318 = vmax.f32 %v3314, 0.0
    %v3319 = vpack.c.bf16 %v3318, %v3317
    %v3320 = vld [vmem:[#allocation11] sm:$0xf]
    %v3321 = vld [vmem:[#allocation11 + $0x4] sm:$0xf]
    %v3322 = vld [vmem:[#allocation11 + $0x8] sm:$0xf]
    %v3323 = vld [vmem:[#allocation11 + $0xc] sm:$0xf]
    %v3324 = vld [vmem:[#allocation11 + $0x10] sm:$0xf]
    %v3325 = vld [vmem:[#allocation11 + $0x14] sm:$0xf]
    %v3326 = vld [vmem:[#allocation11 + $0x18] sm:$0xf]
    %v3327 = vld [vmem:[#allocation11 + $0x1c] sm:$0xf]
    %v3328 = vld [vmem:[#allocation11 + $0x20] sm:$0xf]
    %v3329 = vld [vmem:[#allocation11 + $0x24] sm:$0xf]
    %v3330 = vld [vmem:[#allocation11 + $0x28] sm:$0xf]
    %v3331 = vld [vmem:[#allocation11 + $0x2c] sm:$0xf]
    %v3332 = vld [vmem:[#allocation11 + $0x30] sm:$0xf]
    %v3333 = vld [vmem:[#allocation11 + $0x34] sm:$0xf]
    %v3334 = vld [vmem:[#allocation11 + $0x38] sm:$0xf]
    %v3335 = vld [vmem:[#allocation11 + $0x3c] sm:$0xf]
    %v3336 = vld [vmem:[#allocation13] sm:$0x1]
    %v3338 = vlaneseq
    %v3339 = vshrl.u32 %v3338, 7
    %v3340 = vsub.s32 0, %v3339
    %v3341 = vrot.slane %v3336, %v3340
    %v3359 = vunpack.c.l.b16 %v3320
    %v3360 = vunpack.c.l.b16 %v3321
    %v3361 = vunpack.c.l.b16 %v3322
    %v3362 = vunpack.c.l.b16 %v3323
    %v3363 = vunpack.c.l.b16 %v3324
    %v3364 = vunpack.c.l.b16 %v3325
    %v3365 = vunpack.c.l.b16 %v3326
    %v3366 = vunpack.c.l.b16 %v3327
    %v3367 = vunpack.c.l.b16 %v3328
    %v3368 = vunpack.c.l.b16 %v3329
    %v3369 = vunpack.c.l.b16 %v3330
    %v3370 = vunpack.c.l.b16 %v3331
    %v3371 = vunpack.c.l.b16 %v3332
    %v3372 = vunpack.c.l.b16 %v3333
    %v3373 = vunpack.c.l.b16 %v3334
    %v3374 = vunpack.c.l.b16 %v3335
    %v3375 = vpack.c.b16 %v3360, %v3359
    %v3376 = vpack.c.b16 %v3362, %v3361
    %v3377 = vpack.c.b16 %v3364, %v3363
    %v3378 = vpack.c.b16 %v3366, %v3365
    %v3379 = vpack.c.b16 %v3368, %v3367
    %v3380 = vpack.c.b16 %v3370, %v3369
    %v3381 = vpack.c.b16 %v3372, %v3371
    %v3382 = vpack.c.b16 %v3374, %v3373
    %3391 = vmatprep.subr.bf16.mxu0 0
    %3392 = vmatpush1.bf16.msra.mxu0 %v3382
    %3393 = vmatprep.subr.bf16.mxu0 0
    %3394 = vmatpush1.bf16.msra.mxu0 %v3381
    %3395 = vmatprep.subr.bf16.mxu0 0
    %3396 = vmatpush1.bf16.msra.mxu0 %v3380
    %3397 = vmatprep.subr.bf16.mxu0 0
    %3398 = vmatpush1.bf16.msra.mxu0 %v3379
    %3399 = vmatprep.subr.bf16.mxu0 0
    %3400 = vmatpush1.bf16.msra.mxu0 %v3378
    %3401 = vmatprep.subr.bf16.mxu0 0
    %3402 = vmatpush1.bf16.msra.mxu0 %v3377
    %3403 = vmatprep.subr.bf16.mxu0 0
    %3404 = vmatpush1.bf16.msra.mxu0 %v3376
    %3405 = vmatprep.subr.bf16.mxu0 0
    %3406 = vmatpush1.bf16.msra.mxu0 %v3375
    %3407 = vmatprep.subr.bf16.mxu0 0
    %3408 = vmatpush2.bf16.msra.mxu0 0
    %3409 = vmatprep.subr.bf16.mxu0 0
    %3410 = vmatpush2.bf16.msra.mxu0 0
    %3411 = vmatprep.subr.bf16.mxu0 0
    %3412 = vmatpush2.bf16.msra.mxu0 0
    %3413 = vmatprep.subr.bf16.mxu0 0
    %3414 = vmatpush2.bf16.msra.mxu0 0
    %3415 = vmatprep.subr.bf16.mxu0 0
    %3416 = vmatpush2.bf16.msra.mxu0 0
    %3417 = vmatprep.subr.bf16.mxu0 0
    %3418 = vmatpush2.bf16.msra.mxu0 0
    %3419 = vmatprep.subr.bf16.mxu0 0
    %3420 = vmatpush2.bf16.msra.mxu0 0
    %3421 = vmatprep.subr.bf16.mxu0 0
    %3422 = vmatpush2.bf16.msra.mxu0 0
    %3423 = vmatprep.mubr.bf16.mxu0 0
    %3424 = vmatmul.mubr.bf16.gmra.mxu0 %v3319
    %v3425 = vpop.f32.mrf.mxu0
    %v3426 = vadd.f32 %v3341, %v3425
    %v3427 = vpop.f32.mrf.mxu0
    %v3428 = vpop.f32.mrf.mxu0
    %v3429 = vadd.f32 %v3341, %v3428
    %v3430 = vpop.f32.mrf.mxu0
    %3431 = vdwg.mxu0
    %3432 = vst [vmem:[#allocation14] sm:$0xff] %v3426
    %3433 = vst [vmem:[#allocation14 + $0x8] sm:$0xff] %v3429
    // Predicated region
    $region58: #{tpu_custom_call.1} parent=1 // pred_check
      _
    $region59: #{tpu_custom_call.1} parent=1 // pred_check_branch
      %3435 = sbr.rel (0) target = $region61
    $region60: #{tpu_custom_call.1} parent=1 // pred_region
      %s3437 = ssub.s32 256, 256
      %3438 = vsyncadd [#allocation4], %s3437
      %s3439 = sshll.u32 [#allocation14], 4
      %s3440 = int_to_ptr.vmem [resolvable:$true] %s3439
      %3445 = dma.vmem_to_hbm [thread:$0]  %s3440, 256, %s7, [#allocation4], 128, 128, 8
    $region61: #{tpu_custom_call.1} parent=1 // pred_fallthru
      _
    // Predicated region
    $region62: #{tpu_custom_call.1} parent=1 // pred_check
      _
    $region63: #{tpu_custom_call.1} parent=1 // pred_check_branch
      %3447 = sbr.rel (0) target = $region65
    $region64: #{tpu_custom_call.1} parent=1 // pred_region
      %3448 = dma.done [#allocation4], 256
    $region65: #{tpu_custom_call.1} parent=1 // pred_fallthru
      _
    %3449 = vsyncpa [#allocation3], 1
    %3450 = vsyncpa [#allocation6], 1
    %3451 = vsyncpa [#allocation9], 1
    %3452 = vsyncpa [#allocation12], 1
    %3453 = vsyncpa [#allocation4], 1

</llo_original>
